<compile_context>
chip_gen: v7x
topology: tpu7x:2x2x1
jax: 0.10.0
libtpu: 0.0.40
codegen_flags: <defaults>
</compile_context>

<pallas_src>
import functools

import jax
import jax.numpy as jnp
from jax.experimental import pallas as pl
from jax.experimental.pallas import tpu as pltpu

_LANE = 128


def _layernorm(v, g, b, eps=1e-6):
    mu = jnp.mean(v, axis=-1, keepdims=True)
    var = jnp.mean((v - mu) ** 2, axis=-1, keepdims=True)
    return (v - mu) * jax.lax.rsqrt(var + eps) * g + b


def _gelu_exact(v):
    # matches torch.nn.GELU() default (erf-based, exact); computed in f32
    return 0.5 * v * (1.0 + jax.lax.erf(v * jnp.float32(0.7071067811865476)))


def _gelu_tanh(v):
    # optional tanh approximation (EUP tanh) — NOT bit-matching torch's default exact GELU
    c = jnp.float32(0.7978845608028654)
    return 0.5 * v * (1.0 + jnp.tanh(c * (v + 0.044715 * v * v * v)))


def transformer_block_kernel(
    x_ref,
    wqkv_t_ref, bqkv_ref, wproj_ref, bproj_ref,
    g1_ref, b1_ref, g2_ref, b2_ref,
    wfc1_ref, bfc1_ref, wfc2_ref, bfc2_ref,
    o_ref,
    *, n_heads, head_dim, n_valid, approx_gelu=False,
):
    f32 = jnp.float32
    bf16 = jnp.bfloat16
    D = n_heads * head_dim
    Np = x_ref.shape[0]            # (padded) sequence length = number of keys
    tq = o_ref.shape[0]            # query-tile size
    t = pl.program_id(1)
    q0 = pl.multiple_of(t * tq, tq)

    # ---- LN1 over the full (padded) sequence: needed for K/V ----
    x_all = x_ref[...].astype(f32)                                  # (Np, D)
    h_all = _layernorm(x_all, g1_ref[...], b1_ref[...]).astype(bf16)

    # Transposed projection of one D-row slice of Wqkv (out,in): y^T = W . h  -> (D, n) bf16.
    # Produced slice-by-slice so no full (3D, Np) f32 intermediate stays live.
    def _proj_t(row0, h):
        w = wqkv_t_ref[pl.ds(row0, D), :]                           # (D, D) bf16
        b = bqkv_ref[pl.ds(row0, D), :]                             # (D, 1) f32 bias column
        y = jax.lax.dot_general(
            w, h, dimension_numbers=(((1,), (1,)), ((), ())),
            preferred_element_type=f32) + b
        return y.astype(bf16)

    k_t = _proj_t(D, h_all).reshape(n_heads, head_dim, Np)          # (heads, hd, Np)
    v_t = _proj_t(2 * D, h_all).reshape(n_heads, head_dim, Np)

    # ---- Q only for this query tile (1/sqrt(head_dim) pre-folded into wq/bq at the wrapper) ----
    x_q = x_ref[pl.ds(q0, tq), :].astype(f32)                       # (tq, D)
    h_q = _layernorm(x_q, g1_ref[...], b1_ref[...]).astype(bf16)
    q_t = _proj_t(0, h_q).reshape(n_heads, head_dim, tq)            # (heads, hd, tq)

    # scores (heads, tq, Np): contract head_dim, batched over heads — no in-kernel transposes
    s = jax.lax.dot_general(
        q_t, k_t, dimension_numbers=(((1,), (1,)), ((0,), (0,))),
        preferred_element_type=f32)
    if n_valid < Np:  # static: mask padded key columns
        col = jax.lax.broadcasted_iota(jnp.int32, (1, 1, Np), 2)
        s = jnp.where(col < n_valid, s, jnp.float32(-1e30))
    s = s - jnp.max(s, axis=-1, keepdims=True)
    p = jnp.exp(s)
    # approximate EUP reciprocal: rows sum to ~1 (inference-grade, not bitwise-exact softmax)
    p = p * pl.reciprocal(jnp.sum(p, axis=-1, keepdims=True), approx=True)
    p = p.astype(bf16)

    # out^T (heads, hd, tq) = V^T . P^T, batched over heads (contract the key axis)
    o_t = jax.lax.dot_general(
        v_t, p, dimension_numbers=(((2,), (2,)), ((0,), (0,))),
        preferred_element_type=f32)
    o_t = o_t.reshape(D, tq).astype(bf16)                           # concat heads = leading merge

    # projection: (tq, D) = (o^T)^T . Wproj  (contract the D_in axis of both operands)
    attn = jax.lax.dot_general(
        o_t, wproj_ref[...], dimension_numbers=(((0,), (0,)), ((), ())),
        preferred_element_type=f32) + bproj_ref[...]

    x1 = x_q + attn                                                 # residual 1 (f32)

    # ---- MLP branch on the query tile: LN2 -> fc1 -> GELU -> fc2 ----
    h2 = _layernorm(x1, g2_ref[...], b2_ref[...]).astype(bf16)
    y = jnp.dot(h2, wfc1_ref[...], preferred_element_type=f32) + bfc1_ref[...]
    y = (_gelu_tanh(y) if approx_gelu else _gelu_exact(y)).astype(bf16)
    y = jnp.dot(y, wfc2_ref[...], preferred_element_type=f32) + bfc2_ref[...]

    o_ref[...] = (x1 + y).astype(o_ref.dtype)                       # residual 2


def _vmem_limit_bytes():
    """3/4 of physical VMEM per generation (96 MiB on v5e/v6e, 48 MiB on v7x); safe fallback."""
    try:
        cap = getattr(pltpu.get_tpu_info(), "vmem_capacity_bytes", None)
    except Exception:
        cap = None
    if not cap:
        return 48 * 1024 * 1024
    return (int(cap) * 3) // 4


def transformer_block(x, params, *, n_heads, tq=None, approx_gelu=False):
    B, N, D = x.shape
    head_dim = D // n_heads
    H = params["w_fc1"].shape[1]

    # ---- token padding: lane-align the key/query axis (N=197-style -> 256) ----
    if N > _LANE and N % _LANE != 0:
        Np = ((N + _LANE - 1) // _LANE) * _LANE
    else:
        Np = N
    x_p = x if Np == N else jnp.pad(x, ((0, 0), (0, Np - N), (0, 0)))

    # ---- query-tile size: 256 matches the v6e/v7x 256-wide MXU; fall back to 128 / full ----
    if tq is None:
        if Np >= 256 and Np % 256 == 0:
            tq = 256
        elif Np % _LANE == 0:
            tq = _LANE
        else:
            tq = Np
    assert Np % tq == 0, f"query tile {tq} must divide padded sequence {Np}"
    n_tiles = Np // tq

    # ---- weight prep at the pallas_call boundary (cheap, one-time XLA ops) ----
    # qkv weight in (out, in) layout so the kernel emits q^T/k^T/v^T without transposes;
    # 1/sqrt(head_dim) folded into the Q rows of weight + bias; matmul weights cast to bf16.
    scale_col = jnp.concatenate(
        [jnp.full((D,), jnp.float32(head_dim) ** -0.5, jnp.float32),
         jnp.ones((2 * D,), jnp.float32)])
    wqkv_t = (params["w_qkv"].T.astype(jnp.float32) * scale_col[:, None]).astype(jnp.bfloat16)
    bqkv_c = (params["b_qkv"].reshape(3 * D).astype(jnp.float32) * scale_col).reshape(3 * D, 1)
    wproj = params["w_proj"].astype(jnp.bfloat16)
    wfc1 = params["w_fc1"].astype(jnp.bfloat16)
    wfc2 = params["w_fc2"].astype(jnp.bfloat16)

    def const_spec(shape):
        # grid-invariant weight/bias: single-buffer it (never changes across the grid)
        idx = lambda b, t: (0,) * len(shape)
        try:
            return pl.BlockSpec(shape, idx, pipeline_mode=pl.Buffered(1))
        except (TypeError, AttributeError):   # older jax without pipeline_mode support
            return pl.BlockSpec(shape, idx)

    # Rough cost hint for the XLA scheduler.
    steps = B * n_tiles
    flops = steps * (
        2 * Np * D * 2 * D                         # K,V projections (full sequence)
        + 2 * tq * D * D                           # Q projection (tile)
        + 2 * n_heads * tq * Np * head_dim * 2     # scores + PV
        + 2 * tq * D * D                           # output projection
        + 2 * tq * D * H * 2)                      # fc1 + fc2
    transcendentals = steps * (n_heads * tq * Np + tq * H)
    bytes_accessed = (B * Np * D * 4 * 2
                      + 2 * (3 * D * D + D * D + D * H + H * D) + 4 * 3 * D)

    kernel = functools.partial(
        transformer_block_kernel,
        n_heads=n_heads, head_dim=head_dim, n_valid=N, approx_gelu=approx_gelu)

    out = pl.pallas_call(
        kernel,
        out_shape=jax.ShapeDtypeStruct((B, Np, D), x.dtype),
        grid_spec=pltpu.PrefetchScalarGridSpec(
            num_scalar_prefetch=0,
            grid=(B, n_tiles),
            in_specs=[
                pl.BlockSpec((None, Np, D), lambda b, t: (b, 0, 0)),  # x: full padded seq / batch
                const_spec((3 * D, D)), const_spec((3 * D, 1)),       # qkv weight (out,in) / bias col
                const_spec((D, D)), const_spec((1, D)),               # proj weight / bias
                const_spec((1, D)), const_spec((1, D)),               # norm1 gamma / beta
                const_spec((1, D)), const_spec((1, D)),               # norm2 gamma / beta
                const_spec((D, H)), const_spec((1, H)),               # fc1 weight / bias
                const_spec((H, D)), const_spec((1, D)),               # fc2 weight / bias
            ],
            out_specs=pl.BlockSpec((None, tq, D), lambda b, t: (b, t, 0)),
        ),
        compiler_params=pltpu.CompilerParams(
            dimension_semantics=("parallel", "parallel"),
            vmem_limit_bytes=_vmem_limit_bytes(),
        ),
        cost_estimate=pl.CostEstimate(
            flops=flops, transcendentals=transcendentals, bytes_accessed=bytes_accessed),
    )(
        x_p,
        wqkv_t, bqkv_c, wproj, params["b_proj"],
        params["g1"], params["be1"], params["g2"], params["be2"],
        wfc1, params["b_fc1"], wfc2, params["b_fc2"],
    )
    return out if Np == N else out[:, :N, :]


def reference_block(x, params, *, n_heads):
    # pure-JAX f32 reference mirroring the PyTorch forward pass
    B, N, D = x.shape
    hd = D // n_heads
    scale = hd ** -0.5

    def ln(v, g, b):
        mu = v.mean(-1, keepdims=True)
        var = ((v - mu) ** 2).mean(-1, keepdims=True)
        return (v - mu) / jnp.sqrt(var + 1e-6) * g + b

    h = ln(x, params["g1"], params["be1"])
    qkv = h @ params["w_qkv"] + params["b_qkv"]
    qkv = qkv.reshape(B, N, 3, n_heads, hd).transpose(2, 0, 3, 1, 4)
    q, k, v = qkv[0], qkv[1], qkv[2]                        # (B, heads, N, hd)
    attn = jax.nn.softmax(jnp.einsum("bhnd,bhmd->bhnm", q, k) * scale, axis=-1)
    out = jnp.einsum("bhnm,bhmd->bhnd", attn, v).transpose(0, 2, 1, 3).reshape(B, N, D)
    out = out @ params["w_proj"] + params["b_proj"]
    x = x + out

    h2 = ln(x, params["g2"], params["be2"])
    h2 = h2 @ params["w_fc1"] + params["b_fc1"]
    h2 = jax.nn.gelu(h2, approximate=False)
    h2 = h2 @ params["w_fc2"] + params["b_fc2"]
    return x + h2


if __name__ == "__main__":
    key = jax.random.PRNGKey(0)

    def make_params(k, D, H):
        ks = jax.random.split(k, 12)
        w = lambda kk, shape, s=0.05: jax.random.normal(kk, shape, dtype=jnp.float32) * s
        return {
            "w_qkv": w(ks[0], (D, 3 * D)),  "b_qkv": w(ks[1], (1, 3 * D)),
            "w_proj": w(ks[2], (D, D)),     "b_proj": w(ks[3], (1, D)),
            "g1": 1.0 + w(ks[4], (1, D)),   "be1": w(ks[5], (1, D)),
            "g2": 1.0 + w(ks[6], (1, D)),   "be2": w(ks[7], (1, D)),
            "w_fc1": w(ks[8], (D, H)),      "b_fc1": w(ks[9], (1, H)),
            "w_fc2": w(ks[10], (H, D)),     "b_fc2": w(ks[11], (1, D)),
        }

    # (B, N, D, heads, tq_override) — exercise tiny full-dim, multi-tile, and padded/masked paths
    configs = [
        (2, 8, 32, 4, None),     # tiny (below lane tile; full-dim blocks, no padding)
        (2, 256, 128, 4, 128),   # lane-aligned, 2 query tiles per batch element
        (1, 200, 128, 4, None),  # unaligned token count -> padded to 256 + key masking
    ]
    for i, (B, N, D, heads, tq) in enumerate(configs):
        kp, kx, key = jax.random.split(key, 3)
        params = make_params(kp, D, int(4.0 * D))
        x = jax.random.normal(kx, (B, N, D), dtype=jnp.float32)

        out = jax.block_until_ready(transformer_block(x, params, n_heads=heads, tq=tq))
        ref = reference_block(x, params, n_heads=heads)

        assert out.shape == (B, N, D), f"config {i}: bad shape {out.shape}"
        # tolerance: matmuls run bf16 (f32 accumulation) + EUP approximate softmax reciprocal
        assert jnp.allclose(out, ref, atol=2e-2, rtol=2e-2), f"config {i}: mismatch vs reference"

    print("KERNEL_OK")
</pallas_src>

<mosaic_0001>
module attributes {stable_mosaic.version = 11 : i64} {
  func.func @transformer_block_kernel(%arg0: i32, %arg1: i32, %arg2: memref<1x8x32xf32, #tpu.memory_space<vmem>>, %arg3: memref<96x32xbf16, #tpu.memory_space<vmem>>, %arg4: memref<96x1xf32, #tpu.memory_space<vmem>>, %arg5: memref<32x32xbf16, #tpu.memory_space<vmem>>, %arg6: memref<1x32xf32, #tpu.memory_space<vmem>>, %arg7: memref<1x32xf32, #tpu.memory_space<vmem>>, %arg8: memref<1x32xf32, #tpu.memory_space<vmem>>, %arg9: memref<1x32xf32, #tpu.memory_space<vmem>>, %arg10: memref<1x32xf32, #tpu.memory_space<vmem>>, %arg11: memref<32x128xbf16, #tpu.memory_space<vmem>>, %arg12: memref<1x128xf32, #tpu.memory_space<vmem>>, %arg13: memref<128x32xbf16, #tpu.memory_space<vmem>>, %arg14: memref<1x32xf32, #tpu.memory_space<vmem>>, %arg15: memref<1x8x32xf32, #tpu.memory_space<vmem>>) attributes {dimension_semantics = [#tpu.dimension_semantics<parallel>, #tpu.dimension_semantics<parallel>], iteration_bounds = array<i64: 2, 1>, scalar_prefetch = 0 : i64, scratch_operands = 0 : i64, tpu.core_type = #tpu.core_type<tc>, window_params = [{transform_indices = @transform_0, window_bounds = array<i64: 1, 8, 32>}, {pipeline_mode = #tpu.pipeline_mode<synchronous>, transform_indices = @transform_1, window_bounds = array<i64: 96, 32>}, {pipeline_mode = #tpu.pipeline_mode<synchronous>, transform_indices = @transform_2, window_bounds = array<i64: 96, 1>}, {pipeline_mode = #tpu.pipeline_mode<synchronous>, transform_indices = @transform_3, window_bounds = array<i64: 32, 32>}, {pipeline_mode = #tpu.pipeline_mode<synchronous>, transform_indices = @transform_4, window_bounds = array<i64: 1, 32>}, {pipeline_mode = #tpu.pipeline_mode<synchronous>, transform_indices = @transform_5, window_bounds = array<i64: 1, 32>}, {pipeline_mode = #tpu.pipeline_mode<synchronous>, transform_indices = @transform_6, window_bounds = array<i64: 1, 32>}, {pipeline_mode = #tpu.pipeline_mode<synchronous>, transform_indices = @transform_7, window_bounds = array<i64: 1, 32>}, {pipeline_mode = #tpu.pipeline_mode<synchronous>, transform_indices = @transform_8, window_bounds = array<i64: 1, 32>}, {pipeline_mode = #tpu.pipeline_mode<synchronous>, transform_indices = @transform_9, window_bounds = array<i64: 32, 128>}, {pipeline_mode = #tpu.pipeline_mode<synchronous>, transform_indices = @transform_10, window_bounds = array<i64: 1, 128>}, {pipeline_mode = #tpu.pipeline_mode<synchronous>, transform_indices = @transform_11, window_bounds = array<i64: 128, 32>}, {pipeline_mode = #tpu.pipeline_mode<synchronous>, transform_indices = @transform_12, window_bounds = array<i64: 1, 32>}, {transform_indices = @transform_13, window_bounds = array<i64: 1, 8, 32>}]} {
    %c8_i32 = arith.constant 8 : i32
    %0 = arith.muli %arg1, %c8_i32 : i32
    %1 = tpu.assume_multiple %0, 8 : i32
    %c0 = arith.constant 0 : index
    %c0_0 = arith.constant 0 : index
    %c0_1 = arith.constant 0 : index
    %2 = vector.load %arg2[%c0, %c0_0, %c0_1] : memref<1x8x32xf32, #tpu.memory_space<vmem>>, vector<1x8x32xf32>
    %3 = vector.shape_cast %2 : vector<1x8x32xf32> to vector<8x32xf32>
    %c0_2 = arith.constant 0 : index
    %c0_3 = arith.constant 0 : index
    %4 = vector.load %arg7[%c0_2, %c0_3] : memref<1x32xf32, #tpu.memory_space<vmem>>, vector<1x32xf32>
    %c0_4 = arith.constant 0 : index
    %c0_5 = arith.constant 0 : index
    %5 = vector.load %arg8[%c0_4, %c0_5] : memref<1x32xf32, #tpu.memory_space<vmem>>, vector<1x32xf32>
    %cst = arith.constant dense<0.000000e+00> : vector<8xf32>
    %6 = vector.multi_reduction <add>, %3, %cst [1] : vector<8x32xf32> to vector<8xf32>
    %7 = vector.shape_cast %6 : vector<8xf32> to vector<8x1xf32>
    %cst_6 = arith.constant 3.200000e+01 : f32
    %8 = vector.broadcast %cst_6 : f32 to vector<8x1xf32>
    %9 = arith.divf %7, %8 : vector<8x1xf32>
    %10 = vector.broadcast %9 : vector<8x1xf32> to vector<8x32xf32>
    %11 = arith.subf %3, %10 : vector<8x32xf32>
    %12 = arith.mulf %11, %11 : vector<8x32xf32>
    %cst_7 = arith.constant dense<0.000000e+00> : vector<8xf32>
    %13 = vector.multi_reduction <add>, %12, %cst_7 [1] : vector<8x32xf32> to vector<8xf32>
    %14 = vector.shape_cast %13 : vector<8xf32> to vector<8x1xf32>
    %cst_8 = arith.constant 3.200000e+01 : f32
    %15 = vector.broadcast %cst_8 : f32 to vector<8x1xf32>
    %16 = arith.divf %14, %15 : vector<8x1xf32>
    %17 = vector.broadcast %9 : vector<8x1xf32> to vector<8x32xf32>
    %18 = arith.subf %3, %17 : vector<8x32xf32>
    %cst_9 = arith.constant 9.99999997E-7 : f32
    %19 = vector.broadcast %cst_9 : f32 to vector<8x1xf32>
    %20 = arith.addf %16, %19 : vector<8x1xf32>
    %21 = math.rsqrt %20 : vector<8x1xf32>
    %22 = vector.broadcast %21 : vector<8x1xf32> to vector<8x32xf32>
    %23 = arith.mulf %18, %22 : vector<8x32xf32>
    %24 = vector.broadcast %4 : vector<1x32xf32> to vector<8x32xf32>
    %25 = arith.mulf %23, %24 : vector<8x32xf32>
    %26 = vector.broadcast %5 : vector<1x32xf32> to vector<8x32xf32>
    %27 = arith.addf %25, %26 : vector<8x32xf32>
    %28 = arith.truncf %27 : vector<8x32xf32> to vector<8x32xbf16>
    %c32 = arith.constant 32 : index
    %c0_10 = arith.constant 0 : index
    %29 = vector.load %arg3[%c32, %c0_10] : memref<96x32xbf16, #tpu.memory_space<vmem>>, vector<32x32xbf16>
    %c32_11 = arith.constant 32 : index
    %c0_12 = arith.constant 0 : index
    %30 = vector.load %arg4[%c32_11, %c0_12] : memref<96x1xf32, #tpu.memory_space<vmem>>, vector<32x1xf32>
    %cst_13 = arith.constant dense<0.000000e+00> : vector<32x8xf32>
    %31 = tpu.matmul %29, %28, %cst_13 {dimension_numbers = #tpu.dot_dimension_numbers<[1], [1], [0], [0], [0, 0, 1, 0], [], []>} : vector<32x32xbf16>, vector<8x32xbf16>, vector<32x8xf32> -> vector<32x8xf32>
    %32 = vector.broadcast %30 : vector<32x1xf32> to vector<32x8xf32>
    %33 = arith.addf %31, %32 : vector<32x8xf32>
    %34 = arith.truncf %33 : vector<32x8xf32> to vector<32x8xbf16>
    %35 = vector.shape_cast %34 : vector<32x8xbf16> to vector<4x8x8xbf16>
    %c64 = arith.constant 64 : index
    %c0_14 = arith.constant 0 : index
    %36 = vector.load %arg3[%c64, %c0_14] : memref<96x32xbf16, #tpu.memory_space<vmem>>, vector<32x32xbf16>
    %c64_15 = arith.constant 64 : index
    %c0_16 = arith.constant 0 : index
    %37 = vector.load %arg4[%c64_15, %c0_16] : memref<96x1xf32, #tpu.memory_space<vmem>>, vector<32x1xf32>
    %cst_17 = arith.constant dense<0.000000e+00> : vector<32x8xf32>
    %38 = tpu.matmul %36, %28, %cst_17 {dimension_numbers = #tpu.dot_dimension_numbers<[1], [1], [0], [0], [0, 0, 1, 0], [], []>} : vector<32x32xbf16>, vector<8x32xbf16>, vector<32x8xf32> -> vector<32x8xf32>
    %39 = vector.broadcast %37 : vector<32x1xf32> to vector<32x8xf32>
    %40 = arith.addf %38, %39 : vector<32x8xf32>
    %41 = arith.truncf %40 : vector<32x8xf32> to vector<32x8xbf16>
    %42 = vector.shape_cast %41 : vector<32x8xbf16> to vector<4x8x8xbf16>
    %c0_18 = arith.constant 0 : index
    %43 = arith.index_cast %1 : i32 to index
    %c0_19 = arith.constant 0 : index
    %44 = vector.load %arg2[%c0_18, %43, %c0_19] : memref<1x8x32xf32, #tpu.memory_space<vmem>>, vector<1x8x32xf32>
    %45 = vector.shape_cast %44 : vector<1x8x32xf32> to vector<8x32xf32>
    %c0_20 = arith.constant 0 : index
    %c0_21 = arith.constant 0 : index
    %46 = vector.load %arg7[%c0_20, %c0_21] : memref<1x32xf32, #tpu.memory_space<vmem>>, vector<1x32xf32>
    %c0_22 = arith.constant 0 : index
    %c0_23 = arith.constant 0 : index
    %47 = vector.load %arg8[%c0_22, %c0_23] : memref<1x32xf32, #tpu.memory_space<vmem>>, vector<1x32xf32>
    %cst_24 = arith.constant dense<0.000000e+00> : vector<8xf32>
    %48 = vector.multi_reduction <add>, %45, %cst_24 [1] : vector<8x32xf32> to vector<8xf32>
    %49 = vector.shape_cast %48 : vector<8xf32> to vector<8x1xf32>
    %cst_25 = arith.constant 3.200000e+01 : f32
    %50 = vector.broadcast %cst_25 : f32 to vector<8x1xf32>
    %51 = arith.divf %49, %50 : vector<8x1xf32>
    %52 = vector.broadcast %51 : vector<8x1xf32> to vector<8x32xf32>
    %53 = arith.subf %45, %52 : vector<8x32xf32>
    %54 = arith.mulf %53, %53 : vector<8x32xf32>
    %cst_26 = arith.constant dense<0.000000e+00> : vector<8xf32>
    %55 = vector.multi_reduction <add>, %54, %cst_26 [1] : vector<8x32xf32> to vector<8xf32>
    %56 = vector.shape_cast %55 : vector<8xf32> to vector<8x1xf32>
    %cst_27 = arith.constant 3.200000e+01 : f32
    %57 = vector.broadcast %cst_27 : f32 to vector<8x1xf32>
    %58 = arith.divf %56, %57 : vector<8x1xf32>
    %59 = vector.broadcast %51 : vector<8x1xf32> to vector<8x32xf32>
    %60 = arith.subf %45, %59 : vector<8x32xf32>
    %cst_28 = arith.constant 9.99999997E-7 : f32
    %61 = vector.broadcast %cst_28 : f32 to vector<8x1xf32>
    %62 = arith.addf %58, %61 : vector<8x1xf32>
    %63 = math.rsqrt %62 : vector<8x1xf32>
    %64 = vector.broadcast %63 : vector<8x1xf32> to vector<8x32xf32>
    %65 = arith.mulf %60, %64 : vector<8x32xf32>
    %66 = vector.broadcast %46 : vector<1x32xf32> to vector<8x32xf32>
    %67 = arith.mulf %65, %66 : vector<8x32xf32>
    %68 = vector.broadcast %47 : vector<1x32xf32> to vector<8x32xf32>
    %69 = arith.addf %67, %68 : vector<8x32xf32>
    %70 = arith.truncf %69 : vector<8x32xf32> to vector<8x32xbf16>
    %c0_29 = arith.constant 0 : index
    %c0_30 = arith.constant 0 : index
    %71 = vector.load %arg3[%c0_29, %c0_30] : memref<96x32xbf16, #tpu.memory_space<vmem>>, vector<32x32xbf16>
    %c0_31 = arith.constant 0 : index
    %c0_32 = arith.constant 0 : index
    %72 = vector.load %arg4[%c0_31, %c0_32] : memref<96x1xf32, #tpu.memory_space<vmem>>, vector<32x1xf32>
    %cst_33 = arith.constant dense<0.000000e+00> : vector<32x8xf32>
    %73 = tpu.matmul %71, %70, %cst_33 {dimension_numbers = #tpu.dot_dimension_numbers<[1], [1], [0], [0], [0, 0, 1, 0], [], []>} : vector<32x32xbf16>, vector<8x32xbf16>, vector<32x8xf32> -> vector<32x8xf32>
    %74 = vector.broadcast %72 : vector<32x1xf32> to vector<32x8xf32>
    %75 = arith.addf %73, %74 : vector<32x8xf32>
    %76 = arith.truncf %75 : vector<32x8xf32> to vector<32x8xbf16>
    %77 = vector.shape_cast %76 : vector<32x8xbf16> to vector<4x8x8xbf16>
    %cst_34 = arith.constant dense<0.000000e+00> : vector<4x8x8xf32>
    %78 = tpu.matmul %77, %35, %cst_34 {dimension_numbers = #tpu.dot_dimension_numbers<[1], [1], [2], [2], [0, 0, 0, 2, 1, 2], [0], [0]>} : vector<4x8x8xbf16>, vector<4x8x8xbf16>, vector<4x8x8xf32> -> vector<4x8x8xf32>
    %cst_35 = arith.constant dense<0xFF800000> : vector<4x8xf32>
    %79 = vector.multi_reduction <maximumf>, %78, %cst_35 [2] : vector<4x8x8xf32> to vector<4x8xf32>
    %80 = vector.shape_cast %79 : vector<4x8xf32> to vector<4x8x1xf32>
    %81 = vector.broadcast %80 : vector<4x8x1xf32> to vector<4x8x8xf32>
    %82 = arith.subf %78, %81 : vector<4x8x8xf32>
    %83 = math.exp %82 : vector<4x8x8xf32>
    %cst_36 = arith.constant dense<0.000000e+00> : vector<4x8xf32>
    %84 = vector.multi_reduction <add>, %83, %cst_36 [2] : vector<4x8x8xf32> to vector<4x8xf32>
    %85 = vector.shape_cast %84 : vector<4x8xf32> to vector<4x8x1xf32>
    %86 = tpu.reciprocal %85 {approx = true} : vector<4x8x1xf32> -> vector<4x8x1xf32>
    %87 = vector.broadcast %86 : vector<4x8x1xf32> to vector<4x8x8xf32>
    %88 = arith.mulf %83, %87 : vector<4x8x8xf32>
    %89 = arith.truncf %88 : vector<4x8x8xf32> to vector<4x8x8xbf16>
    %cst_37 = arith.constant dense<0.000000e+00> : vector<4x8x8xf32>
    %90 = tpu.matmul %42, %89, %cst_37 {dimension_numbers = #tpu.dot_dimension_numbers<[2], [2], [1], [1], [0, 0, 0, 1, 1, 1], [0], [0]>} : vector<4x8x8xbf16>, vector<4x8x8xbf16>, vector<4x8x8xf32> -> vector<4x8x8xf32>
    %91 = vector.shape_cast %90 : vector<4x8x8xf32> to vector<32x8xf32>
    %92 = arith.truncf %91 : vector<32x8xf32> to vector<32x8xbf16>
    %c0_38 = arith.constant 0 : index
    %c0_39 = arith.constant 0 : index
    %93 = vector.load %arg5[%c0_38, %c0_39] : memref<32x32xbf16, #tpu.memory_space<vmem>>, vector<32x32xbf16>
    %cst_40 = arith.constant dense<0.000000e+00> : vector<8x32xf32>
    %94 = tpu.matmul %92, %93, %cst_40 {dimension_numbers = #tpu.dot_dimension_numbers<[0], [0], [1], [1], [0, 1, 1, 1], [], []>} : vector<32x8xbf16>, vector<32x32xbf16>, vector<8x32xf32> -> vector<8x32xf32>
    %c0_41 = arith.constant 0 : index
    %c0_42 = arith.constant 0 : index
    %95 = vector.load %arg6[%c0_41, %c0_42] : memref<1x32xf32, #tpu.memory_space<vmem>>, vector<1x32xf32>
    %96 = vector.broadcast %95 : vector<1x32xf32> to vector<8x32xf32>
    %97 = arith.addf %94, %96 : vector<8x32xf32>
    %98 = arith.addf %45, %97 : vector<8x32xf32>
    %c0_43 = arith.constant 0 : index
    %c0_44 = arith.constant 0 : index
    %99 = vector.load %arg9[%c0_43, %c0_44] : memref<1x32xf32, #tpu.memory_space<vmem>>, vector<1x32xf32>
    %c0_45 = arith.constant 0 : index
    %c0_46 = arith.constant 0 : index
    %100 = vector.load %arg10[%c0_45, %c0_46] : memref<1x32xf32, #tpu.memory_space<vmem>>, vector<1x32xf32>
    %cst_47 = arith.constant dense<0.000000e+00> : vector<8xf32>
    %101 = vector.multi_reduction <add>, %98, %cst_47 [1] : vector<8x32xf32> to vector<8xf32>
    %102 = vector.shape_cast %101 : vector<8xf32> to vector<8x1xf32>
    %cst_48 = arith.constant 3.200000e+01 : f32
    %103 = vector.broadcast %cst_48 : f32 to vector<8x1xf32>
    %104 = arith.divf %102, %103 : vector<8x1xf32>
    %105 = vector.broadcast %104 : vector<8x1xf32> to vector<8x32xf32>
    %106 = arith.subf %98, %105 : vector<8x32xf32>
    %107 = arith.mulf %106, %106 : vector<8x32xf32>
    %cst_49 = arith.constant dense<0.000000e+00> : vector<8xf32>
    %108 = vector.multi_reduction <add>, %107, %cst_49 [1] : vector<8x32xf32> to vector<8xf32>
    %109 = vector.shape_cast %108 : vector<8xf32> to vector<8x1xf32>
    %cst_50 = arith.constant 3.200000e+01 : f32
    %110 = vector.broadcast %cst_50 : f32 to vector<8x1xf32>
    %111 = arith.divf %109, %110 : vector<8x1xf32>
    %112 = vector.broadcast %104 : vector<8x1xf32> to vector<8x32xf32>
    %113 = arith.subf %98, %112 : vector<8x32xf32>
    %cst_51 = arith.constant 9.99999997E-7 : f32
    %114 = vector.broadcast %cst_51 : f32 to vector<8x1xf32>
    %115 = arith.addf %111, %114 : vector<8x1xf32>
    %116 = math.rsqrt %115 : vector<8x1xf32>
    %117 = vector.broadcast %116 : vector<8x1xf32> to vector<8x32xf32>
    %118 = arith.mulf %113, %117 : vector<8x32xf32>
    %119 = vector.broadcast %99 : vector<1x32xf32> to vector<8x32xf32>
    %120 = arith.mulf %118, %119 : vector<8x32xf32>
    %121 = vector.broadcast %100 : vector<1x32xf32> to vector<8x32xf32>
    %122 = arith.addf %120, %121 : vector<8x32xf32>
    %123 = arith.truncf %122 : vector<8x32xf32> to vector<8x32xbf16>
    %c0_52 = arith.constant 0 : index
    %c0_53 = arith.constant 0 : index
    %124 = vector.load %arg11[%c0_52, %c0_53] : memref<32x128xbf16, #tpu.memory_space<vmem>>, vector<32x128xbf16>
    %cst_54 = arith.constant dense<0.000000e+00> : vector<8x128xf32>
    %125 = tpu.matmul %123, %124, %cst_54 {dimension_numbers = #tpu.dot_dimension_numbers<[1], [0], [0], [1], [0, 0, 1, 1], [], []>} : vector<8x32xbf16>, vector<32x128xbf16>, vector<8x128xf32> -> vector<8x128xf32>
    %c0_55 = arith.constant 0 : index
    %c0_56 = arith.constant 0 : index
    %126 = vector.load %arg12[%c0_55, %c0_56] : memref<1x128xf32, #tpu.memory_space<vmem>>, vector<1x128xf32>
    %127 = vector.broadcast %126 : vector<1x128xf32> to vector<8x128xf32>
    %128 = arith.addf %125, %127 : vector<8x128xf32>
    %cst_57 = arith.constant 5.000000e-01 : f32
    %129 = vector.broadcast %cst_57 : f32 to vector<8x128xf32>
    %130 = arith.mulf %129, %128 : vector<8x128xf32>
    %cst_58 = arith.constant 0.707106769 : f32
    %131 = vector.broadcast %cst_58 : f32 to vector<8x128xf32>
    %132 = arith.mulf %128, %131 : vector<8x128xf32>
    %133 = math.erf %132 : vector<8x128xf32>
    %cst_59 = arith.constant 1.000000e+00 : f32
    %134 = vector.broadcast %cst_59 : f32 to vector<8x128xf32>
    %135 = arith.addf %134, %133 : vector<8x128xf32>
    %136 = arith.mulf %130, %135 : vector<8x128xf32>
    %137 = arith.truncf %136 : vector<8x128xf32> to vector<8x128xbf16>
    %c0_60 = arith.constant 0 : index
    %c0_61 = arith.constant 0 : index
    %138 = vector.load %arg13[%c0_60, %c0_61] : memref<128x32xbf16, #tpu.memory_space<vmem>>, vector<128x32xbf16>
    %cst_62 = arith.constant dense<0.000000e+00> : vector<8x32xf32>
    %139 = tpu.matmul %137, %138, %cst_62 {dimension_numbers = #tpu.dot_dimension_numbers<[1], [0], [0], [1], [0, 0, 1, 1], [], []>} : vector<8x128xbf16>, vector<128x32xbf16>, vector<8x32xf32> -> vector<8x32xf32>
    %c0_63 = arith.constant 0 : index
    %c0_64 = arith.constant 0 : index
    %140 = vector.load %arg14[%c0_63, %c0_64] : memref<1x32xf32, #tpu.memory_space<vmem>>, vector<1x32xf32>
    %141 = vector.broadcast %140 : vector<1x32xf32> to vector<8x32xf32>
    %142 = arith.addf %139, %141 : vector<8x32xf32>
    %143 = arith.addf %98, %142 : vector<8x32xf32>
    %c0_65 = arith.constant 0 : index
    %c0_66 = arith.constant 0 : index
    %c0_67 = arith.constant 0 : index
    %144 = vector.load %arg15[%c0_65, %c0_66, %c0_67] : memref<1x8x32xf32, #tpu.memory_space<vmem>>, vector<1x8x32xf32>
    %145 = vector.shape_cast %144 : vector<1x8x32xf32> to vector<8x32xf32>
    %146 = vector.shape_cast %143 : vector<8x32xf32> to vector<1x8x32xf32>
    tpu.vector_store %arg15[%c0_65, %c0_66, %c0_67], %146 {strides = array<i32>} : memref<1x8x32xf32, #tpu.memory_space<vmem>>, vector<1x8x32xf32>,
    return
  }
  func.func @transform_0(%arg0: i32, %arg1: i32) -> (i32, i32, i32) {
    %c0_i32 = arith.constant 0 : i32
    %c0_i32_0 = arith.constant 0 : i32
    %c0_i32_1 = arith.constant 0 : i32
    return %arg0, %c0_i32, %c0_i32_0 : i32, i32, i32
  }
  func.func @transform_1(%arg0: i32, %arg1: i32) -> (i32, i32) {
    %c0_i32 = arith.constant 0 : i32
    %c0_i32_0 = arith.constant 0 : i32
    %c0_i32_1 = arith.constant 0 : i32
    return %c0_i32, %c0_i32_0 : i32, i32
  }
  func.func @transform_2(%arg0: i32, %arg1: i32) -> (i32, i32) {
    %c0_i32 = arith.constant 0 : i32
    %c0_i32_0 = arith.constant 0 : i32
    %c0_i32_1 = arith.constant 0 : i32
    return %c0_i32, %c0_i32_0 : i32, i32
  }
  func.func @transform_3(%arg0: i32, %arg1: i32) -> (i32, i32) {
    %c0_i32 = arith.constant 0 : i32
    %c0_i32_0 = arith.constant 0 : i32
    %c0_i32_1 = arith.constant 0 : i32
    return %c0_i32, %c0_i32_0 : i32, i32
  }
  func.func @transform_4(%arg0: i32, %arg1: i32) -> (i32, i32) {
    %c0_i32 = arith.constant 0 : i32
    %c0_i32_0 = arith.constant 0 : i32
    %c0_i32_1 = arith.constant 0 : i32
    return %c0_i32, %c0_i32_0 : i32, i32
  }
  func.func @transform_5(%arg0: i32, %arg1: i32) -> (i32, i32) {
    %c0_i32 = arith.constant 0 : i32
    %c0_i32_0 = arith.constant 0 : i32
    %c0_i32_1 = arith.constant 0 : i32
    return %c0_i32, %c0_i32_0 : i32, i32
  }
  func.func @transform_6(%arg0: i32, %arg1: i32) -> (i32, i32) {
    %c0_i32 = arith.constant 0 : i32
    %c0_i32_0 = arith.constant 0 : i32
    %c0_i32_1 = arith.constant 0 : i32
    return %c0_i32, %c0_i32_0 : i32, i32
  }
  func.func @transform_7(%arg0: i32, %arg1: i32) -> (i32, i32) {
    %c0_i32 = arith.constant 0 : i32
    %c0_i32_0 = arith.constant 0 : i32
    %c0_i32_1 = arith.constant 0 : i32
    return %c0_i32, %c0_i32_0 : i32, i32
  }
  func.func @transform_8(%arg0: i32, %arg1: i32) -> (i32, i32) {
    %c0_i32 = arith.constant 0 : i32
    %c0_i32_0 = arith.constant 0 : i32
    %c0_i32_1 = arith.constant 0 : i32
    return %c0_i32, %c0_i32_0 : i32, i32
  }
  func.func @transform_9(%arg0: i32, %arg1: i32) -> (i32, i32) {
    %c0_i32 = arith.constant 0 : i32
    %c0_i32_0 = arith.constant 0 : i32
    %c0_i32_1 = arith.constant 0 : i32
    return %c0_i32, %c0_i32_0 : i32, i32
  }
  func.func @transform_10(%arg0: i32, %arg1: i32) -> (i32, i32) {
    %c0_i32 = arith.constant 0 : i32
    %c0_i32_0 = arith.constant 0 : i32
    %c0_i32_1 = arith.constant 0 : i32
    return %c0_i32, %c0_i32_0 : i32, i32
  }
  func.func @transform_11(%arg0: i32, %arg1: i32) -> (i32, i32) {
    %c0_i32 = arith.constant 0 : i32
    %c0_i32_0 = arith.constant 0 : i32
    %c0_i32_1 = arith.constant 0 : i32
    return %c0_i32, %c0_i32_0 : i32, i32
  }
  func.func @transform_12(%arg0: i32, %arg1: i32) -> (i32, i32) {
    %c0_i32 = arith.constant 0 : i32
    %c0_i32_0 = arith.constant 0 : i32
    %c0_i32_1 = arith.constant 0 : i32
    return %c0_i32, %c0_i32_0 : i32, i32
  }
  func.func @transform_13(%arg0: i32, %arg1: i32) -> (i32, i32, i32) {
    %c0_i32 = arith.constant 0 : i32
    %c0_i32_0 = arith.constant 0 : i32
    return %arg0, %arg1, %c0_i32 : i32, i32, i32
  }
}

</mosaic_0001>

<llo_original>
// kernel: tpu_custom_call.1
$region0: #{tpu_custom_call.1}
  #allocation0 [shape = 'u32[]', space=smem, size = 0x4, offset = 0x4, fixed_abs, tag = 'smem constant byte address 0x4 - core index']
  #allocation1 [shape = 'u32[144,128]{1,0:T(1,128)}', space=vmem, size = 0x12000, scoped, tag = 'internal scratch']
  %s0 = inlined_call_operand.vmem [shape: f32[2,8,32], index: 0, kind: input, shape index: {}]
  %s1 = inlined_call_operand.vmem [shape: bf16[96,32], index: 1, kind: input, shape index: {}]
  %s2 = inlined_call_operand.vmem [shape: f32[96,1], index: 2, kind: input, shape index: {}]
  %s3 = inlined_call_operand.vmem [shape: bf16[32,32], index: 3, kind: input, shape index: {}]
  %s4 = inlined_call_operand.vmem [shape: f32[1,32], index: 4, kind: input, shape index: {}]
  %s5 = inlined_call_operand.vmem [shape: f32[1,32], index: 5, kind: input, shape index: {}]
  %s6 = inlined_call_operand.vmem [shape: f32[1,32], index: 6, kind: input, shape index: {}]
  %s7 = inlined_call_operand.vmem [shape: f32[1,32], index: 7, kind: input, shape index: {}]
  %s8 = inlined_call_operand.vmem [shape: f32[1,32], index: 8, kind: input, shape index: {}]
  %s9 = inlined_call_operand.vmem [shape: bf16[32,128], index: 9, kind: input, shape index: {}]
  %s10 = inlined_call_operand.vmem [shape: f32[1,128], index: 10, kind: input, shape index: {}]
  %s11 = inlined_call_operand.vmem [shape: bf16[128,32], index: 11, kind: input, shape index: {}]
  %s12 = inlined_call_operand.vmem [shape: f32[1,32], index: 12, kind: input, shape index: {}]
  %s13 = inlined_call_operand.hbm [shape: f32[2,8,32], index: 13, kind: output, shape index: {}]
  %s14 = sld [smem:[#allocation0]]
  $region85: #{tpu_custom_call.1} parent=0
    _
  %s16 = ssub.s32 1, %s14
  %s17 = scalar_select 0, %s16, %s14
  $region1: #{tpu_custom_call.1} parent=0
    #allocation2 [shape = 'u8[8192]{0}', space=vmem, size = 0x2000, scoped, tag = 'output window, operand 0']
    #allocation3 [shape = 's32[2]{0}', space=sflag, size = 0x8, scoped, tag = 'scoped memory for tpu_custom_call.1']
    %18 = vsyncpa [#allocation3], 0
    %s19 = scalar_lea.sflag [#allocation3], 1
    %20 = vsyncpa %s19, 0
    loop: start=0, step=1, limit=4
    $region2: #{tpu_custom_call.1} parent=1 // loop_pre_header
      _
    $region3: #{tpu_custom_call.1} parent=1 // loop_header
      %s22 = sphi 0, %s26
      %p23 = scmp.ge.s32.totalorder %s22, 4
      %s29 = sphi 0, %s41
      %s30 = sphi 0, %s37
      %s31 = sphi 0, %s29
      %s32 = sphi 0, %s30
      %s33 = sphi 0, %s31
      %s34 = sphi 0, %s32
      %s44 = sphi 0, %s46
      %s47 = sphi 0, %s44
      %s48 = sphi 0, %s47
      %s64 = sphi 0, %s48
      %s68 = sphi 0, %s68
      %s70 = sphi 0, %s68
      %s71 = sphi 0, %s70
      %s85 = sphi 0, %s71
      %s89 = sphi 0, %s89
      %s91 = sphi 0, %s89
      %s92 = sphi 0, %s91
      %s106 = sphi 0, %s92
      %s110 = sphi 0, %s110
      %s112 = sphi 0, %s110
      %s113 = sphi 0, %s112
      %s127 = sphi 0, %s113
      %s131 = sphi 0, %s131
      %s133 = sphi 0, %s131
      %s134 = sphi 0, %s133
      %s148 = sphi 0, %s134
      %s152 = sphi 0, %s152
      %s154 = sphi 0, %s152
      %s155 = sphi 0, %s154
      %s169 = sphi 0, %s155
      %s173 = sphi 0, %s173
      %s175 = sphi 0, %s173
      %s176 = sphi 0, %s175
      %s190 = sphi 0, %s176
      %s194 = sphi 0, %s194
      %s196 = sphi 0, %s194
      %s197 = sphi 0, %s196
      %s211 = sphi 0, %s197
      %s215 = sphi 0, %s215
      %s217 = sphi 0, %s215
      %s218 = sphi 0, %s217
      %s232 = sphi 0, %s218
      %s236 = sphi 0, %s236
      %s238 = sphi 0, %s236
      %s239 = sphi 0, %s238
      %s253 = sphi 0, %s239
      %s257 = sphi 0, %s257
      %s259 = sphi 0, %s257
      %s260 = sphi 0, %s259
      %s274 = sphi 0, %s260
      %s278 = sphi 0, %s278
      %s280 = sphi 0, %s278
      %s281 = sphi 0, %s280
      %s295 = sphi 0, %s281
      %s299 = sphi 0, %s299
      %s301 = sphi 0, %s299
      %s302 = sphi 0, %s301
      %s316 = sphi 0, %s302
      %s324 = sphi 0, %s326
      %s327 = sphi 0, %s324
      %s328 = sphi 0, %s327
      %s344 = sphi 0, %s328
    $region4: #{tpu_custom_call.1} parent=1 // loop_header_branch
      %25 = sbr.rel (%p23) target = $region8
    $region5: #{tpu_custom_call.1} parent=1 // loop_body
      %s27 = ssub.s32 %s22, 1
      %s28 = ssub.s32 %s22, 2
      %s35 = sadd.s32 1, %s30
      %p36 = scmp.ge.s32.totalorder %s35, 1
      %s37 = scalar_select %p36, 0, %s35
      %s38 = sadd.s32 1, %s29
      %s39 = scalar_select %p36, %s38, %s29
      %p40 = scmp.ge.s32.totalorder %s39, 2
      %s41 = scalar_select %p40, 0, %s39
      %s42 = ssub.s32 %s29, %s41
      %p43 = scmp.eq.s32.totalorder %s42, 0
      %s45 = sadd.s32 %s44, 1
      %s46 = scalar_select %p43, %s44, %s45
      %p49 = pneg %p43
      %p50 = scmp.eq.s32.totalorder %s22, 1
      %p51 = por %p49, %p50
      %p52 = scmp.ne.s32.totalorder %s44, %s47
      %p53 = scmp.eq.s32.totalorder %s22, 0
      %p54 = por %p52, %p53
      %p55 = scmp.ne.s32.totalorder %s44, %s47
      %p56 = scmp.eq.s32.totalorder %s27, 1
      %p57 = por %p55, %p56
      %p58 = scmp.ne.s32.totalorder %s47, %s48
      %p59 = scmp.eq.s32.totalorder %s27, 0
      %p60 = por %p58, %p59
      %p61 = scmp.ne.s32.totalorder %s47, %s48
      %p62 = scmp.eq.s32.totalorder %s28, 1
      %p63 = por %p61, %p62
      %p65 = scmp.ne.s32.totalorder %s48, %s64
      %p66 = scmp.eq.s32.totalorder %s28, 0
      %p67 = por %p65, %p66
      %s69 = sadd.s32 %s68, 1
      %p72 = scmp.eq.s32.totalorder %s22, 1
      %p73 = scmp.ne.s32.totalorder %s68, %s70
      %p74 = scmp.eq.s32.totalorder %s22, 0
      %p75 = por %p73, %p74
      %p76 = scmp.ne.s32.totalorder %s68, %s70
      %p77 = scmp.eq.s32.totalorder %s27, 1
      %p78 = por %p76, %p77
      %p79 = scmp.ne.s32.totalorder %s70, %s71
      %p80 = scmp.eq.s32.totalorder %s27, 0
      %p81 = por %p79, %p80
      %p82 = scmp.ne.s32.totalorder %s70, %s71
      %p83 = scmp.eq.s32.totalorder %s28, 1
      %p84 = por %p82, %p83
      %p86 = scmp.ne.s32.totalorder %s71, %s85
      %p87 = scmp.eq.s32.totalorder %s28, 0
      %p88 = por %p86, %p87
      %s90 = sadd.s32 %s89, 1
      %p93 = scmp.eq.s32.totalorder %s22, 1
      %p94 = scmp.ne.s32.totalorder %s89, %s91
      %p95 = scmp.eq.s32.totalorder %s22, 0
      %p96 = por %p94, %p95
      %p97 = scmp.ne.s32.totalorder %s89, %s91
      %p98 = scmp.eq.s32.totalorder %s27, 1
      %p99 = por %p97, %p98
      %p100 = scmp.ne.s32.totalorder %s91, %s92
      %p101 = scmp.eq.s32.totalorder %s27, 0
      %p102 = por %p100, %p101
      %p103 = scmp.ne.s32.totalorder %s91, %s92
      %p104 = scmp.eq.s32.totalorder %s28, 1
      %p105 = por %p103, %p104
      %p107 = scmp.ne.s32.totalorder %s92, %s106
      %p108 = scmp.eq.s32.totalorder %s28, 0
      %p109 = por %p107, %p108
      %s111 = sadd.s32 %s110, 1
      %p114 = scmp.eq.s32.totalorder %s22, 1
      %p115 = scmp.ne.s32.totalorder %s110, %s112
      %p116 = scmp.eq.s32.totalorder %s22, 0
      %p117 = por %p115, %p116
      %p118 = scmp.ne.s32.totalorder %s110, %s112
      %p119 = scmp.eq.s32.totalorder %s27, 1
      %p120 = por %p118, %p119
      %p121 = scmp.ne.s32.totalorder %s112, %s113
      %p122 = scmp.eq.s32.totalorder %s27, 0
      %p123 = por %p121, %p122
      %p124 = scmp.ne.s32.totalorder %s112, %s113
      %p125 = scmp.eq.s32.totalorder %s28, 1
      %p126 = por %p124, %p125
      %p128 = scmp.ne.s32.totalorder %s113, %s127
      %p129 = scmp.eq.s32.totalorder %s28, 0
      %p130 = por %p128, %p129
      %s132 = sadd.s32 %s131, 1
      %p135 = scmp.eq.s32.totalorder %s22, 1
      %p136 = scmp.ne.s32.totalorder %s131, %s133
      %p137 = scmp.eq.s32.totalorder %s22, 0
      %p138 = por %p136, %p137
      %p139 = scmp.ne.s32.totalorder %s131, %s133
      %p140 = scmp.eq.s32.totalorder %s27, 1
      %p141 = por %p139, %p140
      %p142 = scmp.ne.s32.totalorder %s133, %s134
      %p143 = scmp.eq.s32.totalorder %s27, 0
      %p144 = por %p142, %p143
      %p145 = scmp.ne.s32.totalorder %s133, %s134
      %p146 = scmp.eq.s32.totalorder %s28, 1
      %p147 = por %p145, %p146
      %p149 = scmp.ne.s32.totalorder %s134, %s148
      %p150 = scmp.eq.s32.totalorder %s28, 0
      %p151 = por %p149, %p150
      %s153 = sadd.s32 %s152, 1
      %p156 = scmp.eq.s32.totalorder %s22, 1
      %p157 = scmp.ne.s32.totalorder %s152, %s154
      %p158 = scmp.eq.s32.totalorder %s22, 0
      %p159 = por %p157, %p158
      %p160 = scmp.ne.s32.totalorder %s152, %s154
      %p161 = scmp.eq.s32.totalorder %s27, 1
      %p162 = por %p160, %p161
      %p163 = scmp.ne.s32.totalorder %s154, %s155
      %p164 = scmp.eq.s32.totalorder %s27, 0
      %p165 = por %p163, %p164
      %p166 = scmp.ne.s32.totalorder %s154, %s155
      %p167 = scmp.eq.s32.totalorder %s28, 1
      %p168 = por %p166, %p167
      %p170 = scmp.ne.s32.totalorder %s155, %s169
      %p171 = scmp.eq.s32.totalorder %s28, 0
      %p172 = por %p170, %p171
      %s174 = sadd.s32 %s173, 1
      %p177 = scmp.eq.s32.totalorder %s22, 1
      %p178 = scmp.ne.s32.totalorder %s173, %s175
      %p179 = scmp.eq.s32.totalorder %s22, 0
      %p180 = por %p178, %p179
      %p181 = scmp.ne.s32.totalorder %s173, %s175
      %p182 = scmp.eq.s32.totalorder %s27, 1
      %p183 = por %p181, %p182
      %p184 = scmp.ne.s32.totalorder %s175, %s176
      %p185 = scmp.eq.s32.totalorder %s27, 0
      %p186 = por %p184, %p185
      %p187 = scmp.ne.s32.totalorder %s175, %s176
      %p188 = scmp.eq.s32.totalorder %s28, 1
      %p189 = por %p187, %p188
      %p191 = scmp.ne.s32.totalorder %s176, %s190
      %p192 = scmp.eq.s32.totalorder %s28, 0
      %p193 = por %p191, %p192
      %s195 = sadd.s32 %s194, 1
      %p198 = scmp.eq.s32.totalorder %s22, 1
      %p199 = scmp.ne.s32.totalorder %s194, %s196
      %p200 = scmp.eq.s32.totalorder %s22, 0
      %p201 = por %p199, %p200
      %p202 = scmp.ne.s32.totalorder %s194, %s196
      %p203 = scmp.eq.s32.totalorder %s27, 1
      %p204 = por %p202, %p203
      %p205 = scmp.ne.s32.totalorder %s196, %s197
      %p206 = scmp.eq.s32.totalorder %s27, 0
      %p207 = por %p205, %p206
      %p208 = scmp.ne.s32.totalorder %s196, %s197
      %p209 = scmp.eq.s32.totalorder %s28, 1
      %p210 = por %p208, %p209
      %p212 = scmp.ne.s32.totalorder %s197, %s211
      %p213 = scmp.eq.s32.totalorder %s28, 0
      %p214 = por %p212, %p213
      %s216 = sadd.s32 %s215, 1
      %p219 = scmp.eq.s32.totalorder %s22, 1
      %p220 = scmp.ne.s32.totalorder %s215, %s217
      %p221 = scmp.eq.s32.totalorder %s22, 0
      %p222 = por %p220, %p221
      %p223 = scmp.ne.s32.totalorder %s215, %s217
      %p224 = scmp.eq.s32.totalorder %s27, 1
      %p225 = por %p223, %p224
      %p226 = scmp.ne.s32.totalorder %s217, %s218
      %p227 = scmp.eq.s32.totalorder %s27, 0
      %p228 = por %p226, %p227
      %p229 = scmp.ne.s32.totalorder %s217, %s218
      %p230 = scmp.eq.s32.totalorder %s28, 1
      %p231 = por %p229, %p230
      %p233 = scmp.ne.s32.totalorder %s218, %s232
      %p234 = scmp.eq.s32.totalorder %s28, 0
      %p235 = por %p233, %p234
      %s237 = sadd.s32 %s236, 1
      %p240 = scmp.eq.s32.totalorder %s22, 1
      %p241 = scmp.ne.s32.totalorder %s236, %s238
      %p242 = scmp.eq.s32.totalorder %s22, 0
      %p243 = por %p241, %p242
      %p244 = scmp.ne.s32.totalorder %s236, %s238
      %p245 = scmp.eq.s32.totalorder %s27, 1
      %p246 = por %p244, %p245
      %p247 = scmp.ne.s32.totalorder %s238, %s239
      %p248 = scmp.eq.s32.totalorder %s27, 0
      %p249 = por %p247, %p248
      %p250 = scmp.ne.s32.totalorder %s238, %s239
      %p251 = scmp.eq.s32.totalorder %s28, 1
      %p252 = por %p250, %p251
      %p254 = scmp.ne.s32.totalorder %s239, %s253
      %p255 = scmp.eq.s32.totalorder %s28, 0
      %p256 = por %p254, %p255
      %s258 = sadd.s32 %s257, 1
      %p261 = scmp.eq.s32.totalorder %s22, 1
      %p262 = scmp.ne.s32.totalorder %s257, %s259
      %p263 = scmp.eq.s32.totalorder %s22, 0
      %p264 = por %p262, %p263
      %p265 = scmp.ne.s32.totalorder %s257, %s259
      %p266 = scmp.eq.s32.totalorder %s27, 1
      %p267 = por %p265, %p266
      %p268 = scmp.ne.s32.totalorder %s259, %s260
      %p269 = scmp.eq.s32.totalorder %s27, 0
      %p270 = por %p268, %p269
      %p271 = scmp.ne.s32.totalorder %s259, %s260
      %p272 = scmp.eq.s32.totalorder %s28, 1
      %p273 = por %p271, %p272
      %p275 = scmp.ne.s32.totalorder %s260, %s274
      %p276 = scmp.eq.s32.totalorder %s28, 0
      %p277 = por %p275, %p276
      %s279 = sadd.s32 %s278, 1
      %p282 = scmp.eq.s32.totalorder %s22, 1
      %p283 = scmp.ne.s32.totalorder %s278, %s280
      %p284 = scmp.eq.s32.totalorder %s22, 0
      %p285 = por %p283, %p284
      %p286 = scmp.ne.s32.totalorder %s278, %s280
      %p287 = scmp.eq.s32.totalorder %s27, 1
      %p288 = por %p286, %p287
      %p289 = scmp.ne.s32.totalorder %s280, %s281
      %p290 = scmp.eq.s32.totalorder %s27, 0
      %p291 = por %p289, %p290
      %p292 = scmp.ne.s32.totalorder %s280, %s281
      %p293 = scmp.eq.s32.totalorder %s28, 1
      %p294 = por %p292, %p293
      %p296 = scmp.ne.s32.totalorder %s281, %s295
      %p297 = scmp.eq.s32.totalorder %s28, 0
      %p298 = por %p296, %p297
      %s300 = sadd.s32 %s299, 1
      %p303 = scmp.eq.s32.totalorder %s22, 1
      %p304 = scmp.ne.s32.totalorder %s299, %s301
      %p305 = scmp.eq.s32.totalorder %s22, 0
      %p306 = por %p304, %p305
      %p307 = scmp.ne.s32.totalorder %s299, %s301
      %p308 = scmp.eq.s32.totalorder %s27, 1
      %p309 = por %p307, %p308
      %p310 = scmp.ne.s32.totalorder %s301, %s302
      %p311 = scmp.eq.s32.totalorder %s27, 0
      %p312 = por %p310, %p311
      %p313 = scmp.ne.s32.totalorder %s301, %s302
      %p314 = scmp.eq.s32.totalorder %s28, 1
      %p315 = por %p313, %p314
      %p317 = scmp.ne.s32.totalorder %s302, %s316
      %p318 = scmp.eq.s32.totalorder %s28, 0
      %p319 = por %p317, %p318
      %s320 = ssub.s32 %s29, %s41
      %s321 = ssub.s32 %s30, %s37
      %s322 = sor.u32 %s320, %s321
      %p323 = scmp.eq.s32.totalorder %s322, 0
      %s325 = sadd.s32 %s324, 1
      %s326 = scalar_select %p323, %s324, %s325
      %p329 = pneg %p323
      %p330 = scmp.eq.s32.totalorder %s22, 1
      %p331 = por %p329, %p330
      %p332 = scmp.ne.s32.totalorder %s324, %s327
      %p333 = scmp.eq.s32.totalorder %s22, 0
      %p334 = por %p332, %p333
      %p335 = scmp.ne.s32.totalorder %s324, %s327
      %p336 = scmp.eq.s32.totalorder %s27, 1
      %p337 = por %p335, %p336
      %p338 = scmp.ne.s32.totalorder %s327, %s328
      %p339 = scmp.eq.s32.totalorder %s27, 0
      %p340 = por %p338, %p339
      %p341 = scmp.ne.s32.totalorder %s327, %s328
      %p342 = scmp.eq.s32.totalorder %s28, 1
      %p343 = por %p341, %p342
      %p345 = scmp.ne.s32.totalorder %s328, %s344
      %p346 = scmp.eq.s32.totalorder %s28, 0
      %p347 = por %p345, %p346
      %p348 = scmp.le.s32.totalorder 1, %s22
      %p349 = scmp.lt.s32.totalorder %s22, 3
      %p350 = pnand %p348, %p349
      %p351 = pneg %p350
      // Predicated region
      $region9: #{tpu_custom_call.1} parent=5 // pred_check
        _
      $region10: #{tpu_custom_call.1} parent=5 // pred_check_branch
        %353 = sbr.rel (%p350) target = $region12
      $region11: #{tpu_custom_call.1} parent=5 // pred_region
        %s354 = ssub.s32 %s22, 1
        // Predicated region
        $region13: #{tpu_custom_call.1} parent=11 // pred_check
          %p355 = pneg %p81
        $region14: #{tpu_custom_call.1} parent=11 // pred_check_branch
          %357 = sbr.rel (%p355) target = $region16
        $region15: #{tpu_custom_call.1} parent=11 // pred_region
          _
        $region16: #{tpu_custom_call.1} parent=11 // pred_fallthru
          _
        // Predicated region
        $region17: #{tpu_custom_call.1} parent=11 // pred_check
          %p358 = pneg %p102
        $region18: #{tpu_custom_call.1} parent=11 // pred_check_branch
          %360 = sbr.rel (%p358) target = $region20
        $region19: #{tpu_custom_call.1} parent=11 // pred_region
          _
        $region20: #{tpu_custom_call.1} parent=11 // pred_fallthru
          _
        // Predicated region
        $region21: #{tpu_custom_call.1} parent=11 // pred_check
          %p361 = pneg %p123
        $region22: #{tpu_custom_call.1} parent=11 // pred_check_branch
          %363 = sbr.rel (%p361) target = $region24
        $region23: #{tpu_custom_call.1} parent=11 // pred_region
          _
        $region24: #{tpu_custom_call.1} parent=11 // pred_fallthru
          _
        // Predicated region
        $region25: #{tpu_custom_call.1} parent=11 // pred_check
          %p364 = pneg %p144
        $region26: #{tpu_custom_call.1} parent=11 // pred_check_branch
          %366 = sbr.rel (%p364) target = $region28
        $region27: #{tpu_custom_call.1} parent=11 // pred_region
          _
        $region28: #{tpu_custom_call.1} parent=11 // pred_fallthru
          _
        // Predicated region
        $region29: #{tpu_custom_call.1} parent=11 // pred_check
          %p367 = pneg %p165
        $region30: #{tpu_custom_call.1} parent=11 // pred_check_branch
          %369 = sbr.rel (%p367) target = $region32
        $region31: #{tpu_custom_call.1} parent=11 // pred_region
          _
        $region32: #{tpu_custom_call.1} parent=11 // pred_fallthru
          _
        // Predicated region
        $region33: #{tpu_custom_call.1} parent=11 // pred_check
          %p370 = pneg %p186
        $region34: #{tpu_custom_call.1} parent=11 // pred_check_branch
          %372 = sbr.rel (%p370) target = $region36
        $region35: #{tpu_custom_call.1} parent=11 // pred_region
          _
        $region36: #{tpu_custom_call.1} parent=11 // pred_fallthru
          _
        // Predicated region
        $region37: #{tpu_custom_call.1} parent=11 // pred_check
          %p373 = pneg %p207
        $region38: #{tpu_custom_call.1} parent=11 // pred_check_branch
          %375 = sbr.rel (%p373) target = $region40
        $region39: #{tpu_custom_call.1} parent=11 // pred_region
          _
        $region40: #{tpu_custom_call.1} parent=11 // pred_fallthru
          _
        // Predicated region
        $region41: #{tpu_custom_call.1} parent=11 // pred_check
          %p376 = pneg %p228
        $region42: #{tpu_custom_call.1} parent=11 // pred_check_branch
          %378 = sbr.rel (%p376) target = $region44
        $region43: #{tpu_custom_call.1} parent=11 // pred_region
          _
        $region44: #{tpu_custom_call.1} parent=11 // pred_fallthru
          _
        // Predicated region
        $region45: #{tpu_custom_call.1} parent=11 // pred_check
          %p379 = pneg %p249
        $region46: #{tpu_custom_call.1} parent=11 // pred_check_branch
          %381 = sbr.rel (%p379) target = $region48
        $region47: #{tpu_custom_call.1} parent=11 // pred_region
          _
        $region48: #{tpu_custom_call.1} parent=11 // pred_fallthru
          _
        // Predicated region
        $region49: #{tpu_custom_call.1} parent=11 // pred_check
          %p382 = pneg %p270
        $region50: #{tpu_custom_call.1} parent=11 // pred_check_branch
          %384 = sbr.rel (%p382) target = $region52
        $region51: #{tpu_custom_call.1} parent=11 // pred_region
          _
        $region52: #{tpu_custom_call.1} parent=11 // pred_fallthru
          _
        // Predicated region
        $region53: #{tpu_custom_call.1} parent=11 // pred_check
          %p385 = pneg %p291
        $region54: #{tpu_custom_call.1} parent=11 // pred_check_branch
          %387 = sbr.rel (%p385) target = $region56
        $region55: #{tpu_custom_call.1} parent=11 // pred_region
          _
        $region56: #{tpu_custom_call.1} parent=11 // pred_fallthru
          _
        // Predicated region
        $region57: #{tpu_custom_call.1} parent=11 // pred_check
          %p388 = pneg %p312
        $region58: #{tpu_custom_call.1} parent=11 // pred_check_branch
          %390 = sbr.rel (%p388) target = $region60
        $region59: #{tpu_custom_call.1} parent=11 // pred_region
          _
        $region60: #{tpu_custom_call.1} parent=11 // pred_fallthru
          _
      $region12: #{tpu_custom_call.1} parent=5 // pred_fallthru
        _
      %p391 = scmp.lt.s32.totalorder %s22, 2
      // Predicated region
      $region61: #{tpu_custom_call.1} parent=5 // pred_check
        %p392 = pneg %p391
      $region62: #{tpu_custom_call.1} parent=5 // pred_check_branch
        %394 = sbr.rel (%p392) target = $region64
      $region63: #{tpu_custom_call.1} parent=5 // pred_region
        // Predicated region
        $region65: #{tpu_custom_call.1} parent=63 // pred_check
          %p395 = pneg %p54
        $region66: #{tpu_custom_call.1} parent=63 // pred_check_branch
          %397 = sbr.rel (%p395) target = $region68
        $region67: #{tpu_custom_call.1} parent=63 // pred_region
          %p398 = scmp.lt.s32.totalorder %s29, 1
          %s399 = scalar_select %p398, %s29, 1
          %s400 = smul.addr %s399, 8
          %s401 = scalar_lea.vmem %s0, %s400
        $region68: #{tpu_custom_call.1} parent=63 // pred_fallthru
          _
      $region64: #{tpu_custom_call.1} parent=5 // pred_fallthru
        _
      %p402 = scmp.le.s32.totalorder 1, %s22
      %p403 = scmp.lt.s32.totalorder %s22, 3
      %p404 = pnand %p402, %p403
      %p405 = pneg %p404
      // Predicated region
      $region69: #{tpu_custom_call.1} parent=5 // pred_check
        _
      $region70: #{tpu_custom_call.1} parent=5 // pred_check_branch
        %407 = sbr.rel (%p404) target = $region72
      $region71: #{tpu_custom_call.1} parent=5 // pred_region
        %s408 = ssub.s32 %s22, 1
        %p409 = scmp.lt.s32.totalorder %s31, 1
        %s410 = scalar_select %p409, %s31, 1
        %s411 = smul.addr %s410, 8
        %s412 = scalar_lea.vmem %s0, %s411
        %p413 = pneg %p60
        %p414 = pneg %p57
        %p415 = pneg %p81
        %p416 = pneg %p78
        %p417 = pneg %p102
        %p418 = pneg %p99
        %p419 = pneg %p123
        %p420 = pneg %p120
        %p421 = pneg %p144
        %p422 = pneg %p141
        %p423 = pneg %p165
        %p424 = pneg %p162
        %p425 = pneg %p186
        %p426 = pneg %p183
        %p427 = pneg %p207
        %p428 = pneg %p204
        %p429 = pneg %p228
        %p430 = pneg %p225
        %p431 = pneg %p249
        %p432 = pneg %p246
        %p433 = pneg %p270
        %p434 = pneg %p267
        %p435 = pneg %p291
        %p436 = pneg %p288
        %p437 = pneg %p312
        %p438 = pneg %p309
        %p439 = pneg %p340
        %p440 = pneg %p337
        %s441 = sand.u32 %s327, 1
        %s442 = scalar_lea.sflag [#allocation3], %s441
        %s443 = sand.u32 %s327, 1
        %s444 = smul.addr %s443, 8
        %s445 = scalar_lea.vmem [#allocation2], %s444
        %p446 = scmp.lt.s32.totalorder %s31, 1
        %s447 = scalar_select %p446, %s31, 1
        %s448 = smul.addr %s447, 8
        %s449 = scalar_lea.vmem %s0, %s448
        %s451 = smul.u32 %s32, 8
        %v452 = vld [vmem:[%s449] sm:$0xff]
        %v453 = vld [vmem:[%s5] sm:$0x1]
        %v454 = vld [vmem:[%s6] sm:$0x1]
        %vm455 = vcmask 261120
        %v456 = vsel %vm455, %v452, 0.0
        %457 = vadd.xlane.f32.xlu0 %v456
        %v458 = vpop.xlane.xlu0 %457
        %v459 = vrcp.pop 32.0
        %v460 = vmul.f32 %v458, %v459
        %v461 = vsub.f32 %v452, %v460
        %v462 = vmul.f32 %v461, %v461
        %v463 = vsel %vm455, %v462, 0.0
        %464 = vadd.xlane.f32.xlu0 %v463
        %v465 = vpop.xlane.xlu0 %464
        %v466 = vmul.f32 %v465, %v459
        %v467 = vadd.f32 %v466, 1e-06
        %v468 = vrsqrt.pop %v467
        %v469 = vmul.f32 %v461, %v468
        %v471 = vlaneseq
        %v472 = vshrl.u32 %v471, 7
        %v473 = vsub.s32 0, %v472
        %v474 = vrot.slane %v453, %v473
        %v476 = vmul.f32 %v469, %v474
        %v478 = vlaneseq
        %v479 = vshrl.u32 %v478, 7
        %v480 = vsub.s32 0, %v479
        %v481 = vrot.slane %v454, %v480
        %v483 = vadd.f32 %v476, %v481
        %v484 = vpack.c.bf16 %v483, %v483
        %v485 = vld [vmem:[%s1 + $0x10] sm:$0xf]
        %v486 = vld [vmem:[%s1 + $0x14] sm:$0xf]
        %v487 = vld [vmem:[%s1 + $0x18] sm:$0xf]
        %v488 = vld [vmem:[%s1 + $0x1c] sm:$0xf]
        %v489 = vld [vmem:[%s2 + $0x20] sm:$0xff]
        %v490 = vld [vmem:[%s2 + $0x28] sm:$0xff]
        %v491 = vld [vmem:[%s2 + $0x30] sm:$0xff]
        %v492 = vld [vmem:[%s2 + $0x38] sm:$0xff]
        %494 = vset.pattern.permute.xlu0 0
        %495 = vperm.xlu0 %494, %v489
        %v496 = vpop.permute.xlu0 %495
        %499 = vset.pattern.permute.xlu0 0
        %500 = vperm.xlu0 %499, %v490
        %v501 = vpop.permute.xlu0 %500
        %504 = vset.pattern.permute.xlu0 0
        %505 = vperm.xlu0 %504, %v491
        %v506 = vpop.permute.xlu0 %505
        %509 = vset.pattern.permute.xlu0 0
        %510 = vperm.xlu0 %509, %v492
        %v511 = vpop.permute.xlu0 %510
        %v517 = vunpack.c.l.b16 %v485
        %v518 = vunpack.c.l.b16 %v486
        %v519 = vunpack.c.l.b16 %v487
        %v520 = vunpack.c.l.b16 %v488
        %v521 = vpack.c.b16 %v518, %v517
        %v522 = vpack.c.b16 %v520, %v519
        %v524 = vsel %vm455, %v521, 0
        %v527 = vsel %vm455, %v522, 0
        %v530 = vsel %vm455, %v484, 0
        %532 = vmatprep.subr.bf16.mxu0 0
        %533 = vmatpush1.bf16.xpose.msra.mxu0 %v530
        %534 = vmatprep.subr.bf16.mxu0 0
        %535 = vmatpush1.bf16.xpose.msra.mxu0 0
        %536 = vmatprep.subr.bf16.mxu0 0
        %537 = vmatpush1.bf16.xpose.msra.mxu0 0
        %538 = vmatprep.subr.bf16.mxu0 0
        %539 = vmatpush1.bf16.xpose.msra.mxu0 0
        %540 = vmatprep.subr.bf16.mxu0 0
        %541 = vmatpush1.bf16.xpose.msra.mxu0 0
        %542 = vmatprep.subr.bf16.mxu0 0
        %543 = vmatpush1.bf16.xpose.msra.mxu0 0
        %544 = vmatprep.subr.bf16.mxu0 0
        %545 = vmatpush1.bf16.xpose.msra.mxu0 0
        %546 = vmatprep.subr.bf16.mxu0 0
        %547 = vmatpush1.bf16.xpose.msra.mxu0 0
        %548 = vmatprep.subr.bf16.mxu0 0
        %549 = vmatpush1.bf16.xpose.msra.mxu0 0
        %550 = vmatprep.subr.bf16.mxu0 0
        %551 = vmatpush1.bf16.xpose.msra.mxu0 0
        %552 = vmatprep.subr.bf16.mxu0 0
        %553 = vmatpush1.bf16.xpose.msra.mxu0 0
        %554 = vmatprep.subr.bf16.mxu0 0
        %555 = vmatpush1.bf16.xpose.msra.mxu0 0
        %556 = vmatprep.subr.bf16.mxu0 0
        %557 = vmatpush1.bf16.xpose.msra.mxu0 0
        %558 = vmatprep.subr.bf16.mxu0 0
        %559 = vmatpush1.bf16.xpose.msra.mxu0 0
        %560 = vmatprep.subr.bf16.mxu0 0
        %561 = vmatpush1.bf16.xpose.msra.mxu0 0
        %562 = vmatprep.subr.bf16.mxu0 0
        %563 = vmatpush1.bf16.xpose.msra.mxu0 0
        %564 = vmatprep.mubr.bf16.mxu0 0
        %565 = vmatmul.mubr.bf16.gmra.mrb[0].mxu0 %v524
        %v566 = vpop.f32.mrb[0].mxu0
        %v567 = vadd.f32 %v496, %v566
        %v568 = vpop.f32.mrb[0].mxu0
        %v569 = vpop.f32.mrb[0].mxu0
        %v570 = vadd.f32 %v501, %v569
        %v571 = vpop.f32.mrb[0].mxu0
        %572 = vmatprep.mubr.bf16.mxu0 0
        %573 = vmatmul.mubr.bf16.gmra.mrb[0].mxu0 %v527
        %v574 = vpop.f32.mrb[0].mxu0
        %v575 = vadd.f32 %v506, %v574
        %v576 = vpop.f32.mrb[0].mxu0
        %v577 = vpop.f32.mrb[0].mxu0
        %v578 = vadd.f32 %v511, %v577
        %v579 = vpop.f32.mrb[0].mxu0
        %580 = vdwg.mxu0
        %v581 = vpack.c.bf16 %v570, %v567
        %v582 = vpack.c.bf16 %v578, %v575
        %v585 = vunpack.c.l.b16 %v581
        %v586 = vunpack.c.h.b16 %v581
        %v587 = vunpack.c.l.b16 %v582
        %v588 = vunpack.c.h.b16 %v582
        %v589 = vpack.c.b16 %v585, %v585
        %v590 = vpack.c.b16 %v586, %v586
        %v591 = vpack.c.b16 %v587, %v587
        %v592 = vpack.c.b16 %v588, %v588
        %v593 = vld [vmem:[%s1 + $0x20] sm:$0xf]
        %v594 = vld [vmem:[%s1 + $0x24] sm:$0xf]
        %v595 = vld [vmem:[%s1 + $0x28] sm:$0xf]
        %v596 = vld [vmem:[%s1 + $0x2c] sm:$0xf]
        %v597 = vld [vmem:[%s2 + $0x40] sm:$0xff]
        %v598 = vld [vmem:[%s2 + $0x48] sm:$0xff]
        %v599 = vld [vmem:[%s2 + $0x50] sm:$0xff]
        %v600 = vld [vmem:[%s2 + $0x58] sm:$0xff]
        %602 = vset.pattern.permute.xlu0 0
        %603 = vperm.xlu0 %602, %v597
        %v604 = vpop.permute.xlu0 %603
        %607 = vset.pattern.permute.xlu0 0
        %608 = vperm.xlu0 %607, %v598
        %v609 = vpop.permute.xlu0 %608
        %612 = vset.pattern.permute.xlu0 0
        %613 = vperm.xlu0 %612, %v599
        %v614 = vpop.permute.xlu0 %613
        %617 = vset.pattern.permute.xlu0 0
        %618 = vperm.xlu0 %617, %v600
        %v619 = vpop.permute.xlu0 %618
        %v625 = vunpack.c.l.b16 %v593
        %v626 = vunpack.c.l.b16 %v594
        %v627 = vunpack.c.l.b16 %v595
        %v628 = vunpack.c.l.b16 %v596
        %v629 = vpack.c.b16 %v626, %v625
        %v630 = vpack.c.b16 %v628, %v627
        %v632 = vsel %vm455, %v629, 0
        %v635 = vsel %vm455, %v630, 0
        %637 = vmatprep.subr.bf16.mxu0 0
        %638 = vmatpush1.bf16.xpose.msra.mxu0 %v530
        %639 = vmatprep.subr.bf16.mxu0 0
        %640 = vmatpush1.bf16.xpose.msra.mxu0 0
        %641 = vmatprep.subr.bf16.mxu0 0
        %642 = vmatpush1.bf16.xpose.msra.mxu0 0
        %643 = vmatprep.subr.bf16.mxu0 0
        %644 = vmatpush1.bf16.xpose.msra.mxu0 0
        %645 = vmatprep.subr.bf16.mxu0 0
        %646 = vmatpush1.bf16.xpose.msra.mxu0 0
        %647 = vmatprep.subr.bf16.mxu0 0
        %648 = vmatpush1.bf16.xpose.msra.mxu0 0
        %649 = vmatprep.subr.bf16.mxu0 0
        %650 = vmatpush1.bf16.xpose.msra.mxu0 0
        %651 = vmatprep.subr.bf16.mxu0 0
        %652 = vmatpush1.bf16.xpose.msra.mxu0 0
        %653 = vmatprep.subr.bf16.mxu0 0
        %654 = vmatpush1.bf16.xpose.msra.mxu0 0
        %655 = vmatprep.subr.bf16.mxu0 0
        %656 = vmatpush1.bf16.xpose.msra.mxu0 0
        %657 = vmatprep.subr.bf16.mxu0 0
        %658 = vmatpush1.bf16.xpose.msra.mxu0 0
        %659 = vmatprep.subr.bf16.mxu0 0
        %660 = vmatpush1.bf16.xpose.msra.mxu0 0
        %661 = vmatprep.subr.bf16.mxu0 0
        %662 = vmatpush1.bf16.xpose.msra.mxu0 0
        %663 = vmatprep.subr.bf16.mxu0 0
        %664 = vmatpush1.bf16.xpose.msra.mxu0 0
        %665 = vmatprep.subr.bf16.mxu0 0
        %666 = vmatpush1.bf16.xpose.msra.mxu0 0
        %667 = vmatprep.subr.bf16.mxu0 0
        %668 = vmatpush1.bf16.xpose.msra.mxu0 0
        %669 = vmatprep.mubr.bf16.mxu0 0
        %670 = vmatmul.mubr.bf16.gmra.mrb[0].mxu0 %v632
        %v671 = vpop.f32.mrb[0].mxu0
        %v672 = vadd.f32 %v604, %v671
        %v673 = vpop.f32.mrb[0].mxu0
        %v674 = vpop.f32.mrb[0].mxu0
        %v675 = vadd.f32 %v609, %v674
        %v676 = vpop.f32.mrb[0].mxu0
        %677 = vmatprep.mubr.bf16.mxu0 0
        %678 = vmatmul.mubr.bf16.gmra.mrb[0].mxu0 %v635
        %v679 = vpop.f32.mrb[0].mxu0
        %v680 = vadd.f32 %v614, %v679
        %v681 = vpop.f32.mrb[0].mxu0
        %v682 = vpop.f32.mrb[0].mxu0
        %v683 = vadd.f32 %v619, %v682
        %v684 = vpop.f32.mrb[0].mxu0
        %685 = vdwg.mxu0
        %v686 = vpack.c.bf16 %v675, %v672
        %v687 = vpack.c.bf16 %v683, %v680
        %v690 = vunpack.c.l.b16 %v686
        %v691 = vunpack.c.h.b16 %v686
        %v692 = vunpack.c.l.b16 %v687
        %v693 = vunpack.c.h.b16 %v687
        %v694 = vpack.c.b16 %v690, %v690
        %v695 = vpack.c.b16 %v691, %v691
        %v696 = vpack.c.b16 %v692, %v692
        %v697 = vpack.c.b16 %v693, %v693
        %s698 = scalar_lea.vmem %s449, %s451
        %v699 = vld [vmem:[%s698] sm:$0xff]
        %v700 = vsel %vm455, %v699, 0.0
        %701 = vadd.xlane.f32.xlu0 %v700
        %v702 = vpop.xlane.xlu0 %701
        %v703 = vmul.f32 %v702, %v459
        %v704 = vsub.f32 %v699, %v703
        %v705 = vmul.f32 %v704, %v704
        %v706 = vsel %vm455, %v705, 0.0
        %707 = vadd.xlane.f32.xlu0 %v706
        %v708 = vpop.xlane.xlu0 %707
        %v709 = vmul.f32 %v708, %v459
        %v710 = vadd.f32 %v709, 1e-06
        %v711 = vrsqrt.pop %v710
        %v712 = vmul.f32 %v704, %v711
        %v713 = vmul.f32 %v712, %v474
        %v714 = vadd.f32 %v713, %v481
        %v715 = vpack.c.bf16 %v714, %v714
        %v716 = vld [vmem:[%s1] sm:$0xf]
        %v717 = vld [vmem:[%s1 + $0x4] sm:$0xf]
        %v718 = vld [vmem:[%s1 + $0x8] sm:$0xf]
        %v719 = vld [vmem:[%s1 + $0xc] sm:$0xf]
        %v720 = vld [vmem:[%s2] sm:$0xff]
        %v721 = vld [vmem:[%s2 + $0x8] sm:$0xff]
        %v722 = vld [vmem:[%s2 + $0x10] sm:$0xff]
        %v723 = vld [vmem:[%s2 + $0x18] sm:$0xff]
        %725 = vset.pattern.permute.xlu0 0
        %726 = vperm.xlu0 %725, %v720
        %v727 = vpop.permute.xlu0 %726
        %730 = vset.pattern.permute.xlu0 0
        %731 = vperm.xlu0 %730, %v721
        %v732 = vpop.permute.xlu0 %731
        %735 = vset.pattern.permute.xlu0 0
        %736 = vperm.xlu0 %735, %v722
        %v737 = vpop.permute.xlu0 %736
        %740 = vset.pattern.permute.xlu0 0
        %741 = vperm.xlu0 %740, %v723
        %v742 = vpop.permute.xlu0 %741
        %v748 = vunpack.c.l.b16 %v716
        %v749 = vunpack.c.l.b16 %v717
        %v750 = vunpack.c.l.b16 %v718
        %v751 = vunpack.c.l.b16 %v719
        %v752 = vpack.c.b16 %v749, %v748
        %v753 = vpack.c.b16 %v751, %v750
        %v755 = vsel %vm455, %v752, 0
        %v758 = vsel %vm455, %v753, 0
        %v761 = vsel %vm455, %v715, 0
        %763 = vmatprep.subr.bf16.mxu0 0
        %764 = vmatpush1.bf16.xpose.msra.mxu0 %v761
        %765 = vmatprep.subr.bf16.mxu0 0
        %766 = vmatpush1.bf16.xpose.msra.mxu0 0
        %767 = vmatprep.subr.bf16.mxu0 0
        %768 = vmatpush1.bf16.xpose.msra.mxu0 0
        %769 = vmatprep.subr.bf16.mxu0 0
        %770 = vmatpush1.bf16.xpose.msra.mxu0 0
        %771 = vmatprep.subr.bf16.mxu0 0
        %772 = vmatpush1.bf16.xpose.msra.mxu0 0
        %773 = vmatprep.subr.bf16.mxu0 0
        %774 = vmatpush1.bf16.xpose.msra.mxu0 0
        %775 = vmatprep.subr.bf16.mxu0 0
        %776 = vmatpush1.bf16.xpose.msra.mxu0 0
        %777 = vmatprep.subr.bf16.mxu0 0
        %778 = vmatpush1.bf16.xpose.msra.mxu0 0
        %779 = vmatprep.subr.bf16.mxu0 0
        %780 = vmatpush1.bf16.xpose.msra.mxu0 0
        %781 = vmatprep.subr.bf16.mxu0 0
        %782 = vmatpush1.bf16.xpose.msra.mxu0 0
        %783 = vmatprep.subr.bf16.mxu0 0
        %784 = vmatpush1.bf16.xpose.msra.mxu0 0
        %785 = vmatprep.subr.bf16.mxu0 0
        %786 = vmatpush1.bf16.xpose.msra.mxu0 0
        %787 = vmatprep.subr.bf16.mxu0 0
        %788 = vmatpush1.bf16.xpose.msra.mxu0 0
        %789 = vmatprep.subr.bf16.mxu0 0
        %790 = vmatpush1.bf16.xpose.msra.mxu0 0
        %791 = vmatprep.subr.bf16.mxu0 0
        %792 = vmatpush1.bf16.xpose.msra.mxu0 0
        %793 = vmatprep.subr.bf16.mxu0 0
        %794 = vmatpush1.bf16.xpose.msra.mxu0 0
        %795 = vmatprep.mubr.bf16.mxu0 0
        %796 = vmatmul.mubr.bf16.gmra.mrb[0].mxu0 %v755
        %v797 = vpop.f32.mrb[0].mxu0
        %v798 = vadd.f32 %v727, %v797
        %v799 = vpop.f32.mrb[0].mxu0
        %v800 = vpop.f32.mrb[0].mxu0
        %v801 = vadd.f32 %v732, %v800
        %v802 = vpop.f32.mrb[0].mxu0
        %803 = vmatprep.mubr.bf16.mxu0 0
        %804 = vmatmul.mubr.bf16.gmra.mrb[0].mxu0 %v758
        %v805 = vpop.f32.mrb[0].mxu0
        %v806 = vadd.f32 %v737, %v805
        %v807 = vpop.f32.mrb[0].mxu0
        %v808 = vpop.f32.mrb[0].mxu0
        %v809 = vadd.f32 %v742, %v808
        %v810 = vpop.f32.mrb[0].mxu0
        %811 = vdwg.mxu0
        %v812 = vpack.c.bf16 %v801, %v798
        %v813 = vpack.c.bf16 %v809, %v806
        %v816 = vunpack.c.l.b16 %v812
        %v817 = vunpack.c.h.b16 %v812
        %v818 = vunpack.c.l.b16 %v813
        %v819 = vunpack.c.h.b16 %v813
        %v820 = vpack.c.b16 %v816, %v816
        %v821 = vpack.c.b16 %v817, %v817
        %v822 = vpack.c.b16 %v818, %v818
        %v823 = vpack.c.b16 %v819, %v819
        %828 = vxpose.xlu0.c.b16.start [1/8] %v820, 128
        %829 = vxpose.xlu0.c.b16.cont [2/8] 0, 128
        %830 = vxpose.xlu0.c.b16.cont [3/8] 0, 128
        %831 = vxpose.xlu0.c.b16.cont [4/8] 0, 128
        %832 = vxpose.xlu0.c.b16.cont [5/8] 0, 128
        %833 = vxpose.xlu0.c.b16.cont [6/8] 0, 128
        %834 = vxpose.xlu0.c.b16.cont [7/8] 0, 128
        %835 = vxpose.xlu0.c.b16.end [8/8] 0, 128
        %v836 = vpop.trf.xlu0
        %v837 = vpop.trf.xlu0
        %v838 = vpop.trf.xlu0
        %v839 = vpop.trf.xlu0
        %v840 = vpop.trf.xlu0
        %v841 = vpop.trf.xlu0
        %v842 = vpop.trf.xlu0
        %v843 = vpop.trf.xlu0
        %vm844 = vcmask 64512
        %v846 = vsel %vm844, %v836, 0
        %vm848 = vcmask 1043456
        %v850 = vsel %vm848, %v589, 0
        %852 = vmatprep.subr.bf16.mxu0 0
        %853 = vmatpush1.bf16.msra.mxu0 %v850
        %854 = vmatprep.subr.bf16.mxu0 0
        %855 = vmatpush1.bf16.msra.mxu0 0
        %856 = vmatprep.subr.bf16.mxu0 0
        %857 = vmatpush1.bf16.msra.mxu0 0
        %858 = vmatprep.subr.bf16.mxu0 0
        %859 = vmatpush1.bf16.msra.mxu0 0
        %860 = vmatprep.subr.bf16.mxu0 0
        %861 = vmatpush1.bf16.msra.mxu0 0
        %862 = vmatprep.subr.bf16.mxu0 0
        %863 = vmatpush1.bf16.msra.mxu0 0
        %864 = vmatprep.subr.bf16.mxu0 0
        %865 = vmatpush1.bf16.msra.mxu0 0
        %866 = vmatprep.subr.bf16.mxu0 0
        %867 = vmatpush1.bf16.msra.mxu0 0
        %868 = vmatprep.subr.bf16.mxu0 0
        %869 = vmatpush1.bf16.msra.mxu0 0
        %870 = vmatprep.subr.bf16.mxu0 0
        %871 = vmatpush1.bf16.msra.mxu0 0
        %872 = vmatprep.subr.bf16.mxu0 0
        %873 = vmatpush1.bf16.msra.mxu0 0
        %874 = vmatprep.subr.bf16.mxu0 0
        %875 = vmatpush1.bf16.msra.mxu0 0
        %876 = vmatprep.subr.bf16.mxu0 0
        %877 = vmatpush1.bf16.msra.mxu0 0
        %878 = vmatprep.subr.bf16.mxu0 0
        %879 = vmatpush1.bf16.msra.mxu0 0
        %880 = vmatprep.subr.bf16.mxu0 0
        %881 = vmatpush1.bf16.msra.mxu0 0
        %882 = vmatprep.subr.bf16.mxu0 0
        %883 = vmatpush1.bf16.msra.mxu0 0
        %884 = vmatprep.mubr.bf16.mxu0 0
        %885 = vmatmul.mubr.bf16.gmra.mrb[0].mxu0 %v846
        %v886 = vpop.f32.mrb[0].mxu0
        %v887 = vadd.f32 0.0, %v886
        %v888 = vpop.f32.mrb[0].mxu0
        %v889 = vpop.f32.mrb[0].mxu0
        %v890 = vpop.f32.mrb[0].mxu0
        %891 = vdwg.mxu0
        %892 = vxpose.xlu0.c.b16.start [1/8] %v821, 128
        %893 = vxpose.xlu0.c.b16.cont [2/8] 0, 128
        %894 = vxpose.xlu0.c.b16.cont [3/8] 0, 128
        %895 = vxpose.xlu0.c.b16.cont [4/8] 0, 128
        %896 = vxpose.xlu0.c.b16.cont [5/8] 0, 128
        %897 = vxpose.xlu0.c.b16.cont [6/8] 0, 128
        %898 = vxpose.xlu0.c.b16.cont [7/8] 0, 128
        %899 = vxpose.xlu0.c.b16.end [8/8] 0, 128
        %v900 = vpop.trf.xlu0
        %v901 = vpop.trf.xlu0
        %v902 = vpop.trf.xlu0
        %v903 = vpop.trf.xlu0
        %v904 = vpop.trf.xlu0
        %v905 = vpop.trf.xlu0
        %v906 = vpop.trf.xlu0
        %v907 = vpop.trf.xlu0
        %v909 = vsel %vm844, %v900, 0
        %v912 = vsel %vm848, %v590, 0
        %914 = vmatprep.subr.bf16.mxu0 0
        %915 = vmatpush1.bf16.msra.mxu0 %v912
        %916 = vmatprep.subr.bf16.mxu0 0
        %917 = vmatpush1.bf16.msra.mxu0 0
        %918 = vmatprep.subr.bf16.mxu0 0
        %919 = vmatpush1.bf16.msra.mxu0 0
        %920 = vmatprep.subr.bf16.mxu0 0
        %921 = vmatpush1.bf16.msra.mxu0 0
        %922 = vmatprep.subr.bf16.mxu0 0
        %923 = vmatpush1.bf16.msra.mxu0 0
        %924 = vmatprep.subr.bf16.mxu0 0
        %925 = vmatpush1.bf16.msra.mxu0 0
        %926 = vmatprep.subr.bf16.mxu0 0
        %927 = vmatpush1.bf16.msra.mxu0 0
        %928 = vmatprep.subr.bf16.mxu0 0
        %929 = vmatpush1.bf16.msra.mxu0 0
        %930 = vmatprep.subr.bf16.mxu0 0
        %931 = vmatpush1.bf16.msra.mxu0 0
        %932 = vmatprep.subr.bf16.mxu0 0
        %933 = vmatpush1.bf16.msra.mxu0 0
        %934 = vmatprep.subr.bf16.mxu0 0
        %935 = vmatpush1.bf16.msra.mxu0 0
        %936 = vmatprep.subr.bf16.mxu0 0
        %937 = vmatpush1.bf16.msra.mxu0 0
        %938 = vmatprep.subr.bf16.mxu0 0
        %939 = vmatpush1.bf16.msra.mxu0 0
        %940 = vmatprep.subr.bf16.mxu0 0
        %941 = vmatpush1.bf16.msra.mxu0 0
        %942 = vmatprep.subr.bf16.mxu0 0
        %943 = vmatpush1.bf16.msra.mxu0 0
        %944 = vmatprep.subr.bf16.mxu0 0
        %945 = vmatpush1.bf16.msra.mxu0 0
        %946 = vmatprep.mubr.bf16.mxu0 0
        %947 = vmatmul.mubr.bf16.gmra.mrb[0].mxu0 %v909
        %v948 = vpop.f32.mrb[0].mxu0
        %v949 = vadd.f32 0.0, %v948
        %v950 = vpop.f32.mrb[0].mxu0
        %v951 = vpop.f32.mrb[0].mxu0
        %v952 = vpop.f32.mrb[0].mxu0
        %953 = vdwg.mxu0
        %954 = vxpose.xlu0.c.b16.start [1/8] %v822, 128
        %955 = vxpose.xlu0.c.b16.cont [2/8] 0, 128
        %956 = vxpose.xlu0.c.b16.cont [3/8] 0, 128
        %957 = vxpose.xlu0.c.b16.cont [4/8] 0, 128
        %958 = vxpose.xlu0.c.b16.cont [5/8] 0, 128
        %959 = vxpose.xlu0.c.b16.cont [6/8] 0, 128
        %960 = vxpose.xlu0.c.b16.cont [7/8] 0, 128
        %961 = vxpose.xlu0.c.b16.end [8/8] 0, 128
        %v962 = vpop.trf.xlu0
        %v963 = vpop.trf.xlu0
        %v964 = vpop.trf.xlu0
        %v965 = vpop.trf.xlu0
        %v966 = vpop.trf.xlu0
        %v967 = vpop.trf.xlu0
        %v968 = vpop.trf.xlu0
        %v969 = vpop.trf.xlu0
        %v971 = vsel %vm844, %v962, 0
        %v974 = vsel %vm848, %v591, 0
        %976 = vmatprep.subr.bf16.mxu0 0
        %977 = vmatpush1.bf16.msra.mxu0 %v974
        %978 = vmatprep.subr.bf16.mxu0 0
        %979 = vmatpush1.bf16.msra.mxu0 0
        %980 = vmatprep.subr.bf16.mxu0 0
        %981 = vmatpush1.bf16.msra.mxu0 0
        %982 = vmatprep.subr.bf16.mxu0 0
        %983 = vmatpush1.bf16.msra.mxu0 0
        %984 = vmatprep.subr.bf16.mxu0 0
        %985 = vmatpush1.bf16.msra.mxu0 0
        %986 = vmatprep.subr.bf16.mxu0 0
        %987 = vmatpush1.bf16.msra.mxu0 0
        %988 = vmatprep.subr.bf16.mxu0 0
        %989 = vmatpush1.bf16.msra.mxu0 0
        %990 = vmatprep.subr.bf16.mxu0 0
        %991 = vmatpush1.bf16.msra.mxu0 0
        %992 = vmatprep.subr.bf16.mxu0 0
        %993 = vmatpush1.bf16.msra.mxu0 0
        %994 = vmatprep.subr.bf16.mxu0 0
        %995 = vmatpush1.bf16.msra.mxu0 0
        %996 = vmatprep.subr.bf16.mxu0 0
        %997 = vmatpush1.bf16.msra.mxu0 0
        %998 = vmatprep.subr.bf16.mxu0 0
        %999 = vmatpush1.bf16.msra.mxu0 0
        %1000 = vmatprep.subr.bf16.mxu0 0
        %1001 = vmatpush1.bf16.msra.mxu0 0
        %1002 = vmatprep.subr.bf16.mxu0 0
        %1003 = vmatpush1.bf16.msra.mxu0 0
        %1004 = vmatprep.subr.bf16.mxu0 0
        %1005 = vmatpush1.bf16.msra.mxu0 0
        %1006 = vmatprep.subr.bf16.mxu0 0
        %1007 = vmatpush1.bf16.msra.mxu0 0
        %1008 = vmatprep.mubr.bf16.mxu0 0
        %1009 = vmatmul.mubr.bf16.gmra.mrb[0].mxu0 %v971
        %v1010 = vpop.f32.mrb[0].mxu0
        %v1011 = vadd.f32 0.0, %v1010
        %v1012 = vpop.f32.mrb[0].mxu0
        %v1013 = vpop.f32.mrb[0].mxu0
        %v1014 = vpop.f32.mrb[0].mxu0
        %1015 = vdwg.mxu0
        %1016 = vxpose.xlu0.c.b16.start [1/8] %v823, 128
        %1017 = vxpose.xlu0.c.b16.cont [2/8] 0, 128
        %1018 = vxpose.xlu0.c.b16.cont [3/8] 0, 128
        %1019 = vxpose.xlu0.c.b16.cont [4/8] 0, 128
        %1020 = vxpose.xlu0.c.b16.cont [5/8] 0, 128
        %1021 = vxpose.xlu0.c.b16.cont [6/8] 0, 128
        %1022 = vxpose.xlu0.c.b16.cont [7/8] 0, 128
        %1023 = vxpose.xlu0.c.b16.end [8/8] 0, 128
        %v1024 = vpop.trf.xlu0
        %v1025 = vpop.trf.xlu0
        %v1026 = vpop.trf.xlu0
        %v1027 = vpop.trf.xlu0
        %v1028 = vpop.trf.xlu0
        %v1029 = vpop.trf.xlu0
        %v1030 = vpop.trf.xlu0
        %v1031 = vpop.trf.xlu0
        %v1033 = vsel %vm844, %v1024, 0
        %v1036 = vsel %vm848, %v592, 0
        %1038 = vmatprep.subr.bf16.mxu0 0
        %1039 = vmatpush1.bf16.msra.mxu0 %v1036
        %1040 = vmatprep.subr.bf16.mxu0 0
        %1041 = vmatpush1.bf16.msra.mxu0 0
        %1042 = vmatprep.subr.bf16.mxu0 0
        %1043 = vmatpush1.bf16.msra.mxu0 0
        %1044 = vmatprep.subr.bf16.mxu0 0
        %1045 = vmatpush1.bf16.msra.mxu0 0
        %1046 = vmatprep.subr.bf16.mxu0 0
        %1047 = vmatpush1.bf16.msra.mxu0 0
        %1048 = vmatprep.subr.bf16.mxu0 0
        %1049 = vmatpush1.bf16.msra.mxu0 0
        %1050 = vmatprep.subr.bf16.mxu0 0
        %1051 = vmatpush1.bf16.msra.mxu0 0
        %1052 = vmatprep.subr.bf16.mxu0 0
        %1053 = vmatpush1.bf16.msra.mxu0 0
        %1054 = vmatprep.subr.bf16.mxu0 0
        %1055 = vmatpush1.bf16.msra.mxu0 0
        %1056 = vmatprep.subr.bf16.mxu0 0
        %1057 = vmatpush1.bf16.msra.mxu0 0
        %1058 = vmatprep.subr.bf16.mxu0 0
        %1059 = vmatpush1.bf16.msra.mxu0 0
        %1060 = vmatprep.subr.bf16.mxu0 0
        %1061 = vmatpush1.bf16.msra.mxu0 0
        %1062 = vmatprep.subr.bf16.mxu0 0
        %1063 = vmatpush1.bf16.msra.mxu0 0
        %1064 = vmatprep.subr.bf16.mxu0 0
        %1065 = vmatpush1.bf16.msra.mxu0 0
        %1066 = vmatprep.subr.bf16.mxu0 0
        %1067 = vmatpush1.bf16.msra.mxu0 0
        %1068 = vmatprep.subr.bf16.mxu0 0
        %1069 = vmatpush1.bf16.msra.mxu0 0
        %1070 = vmatprep.mubr.bf16.mxu0 0
        %1071 = vmatmul.mubr.bf16.gmra.mrb[0].mxu0 %v1033
        %v1072 = vpop.f32.mrb[0].mxu0
        %v1073 = vadd.f32 0.0, %v1072
        %v1074 = vpop.f32.mrb[0].mxu0
        %v1075 = vpop.f32.mrb[0].mxu0
        %v1076 = vpop.f32.mrb[0].mxu0
        %1077 = vdwg.mxu0
        %v1078 = vsel %vm844, %v887, -inf
        %1079 = vmax.xlane.f32.xlu0 %v1078
        %v1080 = vpop.xlane.xlu0 %1079
        %v1081 = vsel %vm844, %v949, -inf
        %1082 = vmax.xlane.f32.xlu0 %v1081
        %v1083 = vpop.xlane.xlu0 %1082
        %v1084 = vsel %vm844, %v1011, -inf
        %1085 = vmax.xlane.f32.xlu0 %v1084
        %v1086 = vpop.xlane.xlu0 %1085
        %v1087 = vsel %vm844, %v1073, -inf
        %1088 = vmax.xlane.f32.xlu0 %v1087
        %v1089 = vpop.xlane.xlu0 %1088
        %v1090 = vsub.f32 %v887, %v1080
        %v1091 = vsub.f32 %v949, %v1083
        %v1092 = vsub.f32 %v1011, %v1086
        %v1093 = vsub.f32 %v1073, %v1089
        %v1094 = vmul.f32 %v1090, 1.442695
        %v1095 = vpow.pop %v1094
        %v1096 = vmul.f32 %v1091, 1.442695
        %v1097 = vpow.pop %v1096
        %v1098 = vmul.f32 %v1092, 1.442695
        %v1099 = vpow.pop %v1098
        %v1100 = vmul.f32 %v1093, 1.442695
        %v1101 = vpow.pop %v1100
        %v1102 = vsel %vm844, %v1095, 0.0
        %1103 = vadd.xlane.f32.xlu0 %v1102
        %v1104 = vpop.xlane.xlu0 %1103
        %v1105 = vsel %vm844, %v1097, 0.0
        %1106 = vadd.xlane.f32.xlu0 %v1105
        %v1107 = vpop.xlane.xlu0 %1106
        %v1108 = vsel %vm844, %v1099, 0.0
        %1109 = vadd.xlane.f32.xlu0 %v1108
        %v1110 = vpop.xlane.xlu0 %1109
        %v1111 = vsel %vm844, %v1101, 0.0
        %1112 = vadd.xlane.f32.xlu0 %v1111
        %v1113 = vpop.xlane.xlu0 %1112
        %v1114 = vrcp.pop %v1104
        %v1115 = vrcp.pop %v1107
        %v1116 = vrcp.pop %v1110
        %v1117 = vrcp.pop %v1113
        %v1118 = vmul.f32 %v1095, %v1114
        %v1119 = vmul.f32 %v1097, %v1115
        %v1120 = vmul.f32 %v1099, %v1116
        %v1121 = vmul.f32 %v1101, %v1117
        %v1122 = vpack.c.bf16 %v1118, %v1118
        %v1123 = vpack.c.bf16 %v1119, %v1119
        %v1124 = vpack.c.bf16 %v1120, %v1120
        %v1125 = vpack.c.bf16 %v1121, %v1121
        %v1127 = vsel %vm844, %v694, 0
        %v1130 = vsel %vm844, %v1122, 0
        %1132 = vmatprep.subr.bf16.mxu0 0
        %1133 = vmatpush1.bf16.xpose.msra.mxu0 %v1130
        %1134 = vmatprep.subr.bf16.mxu0 0
        %1135 = vmatpush1.bf16.xpose.msra.mxu0 0
        %1136 = vmatprep.subr.bf16.mxu0 0
        %1137 = vmatpush1.bf16.xpose.msra.mxu0 0
        %1138 = vmatprep.subr.bf16.mxu0 0
        %1139 = vmatpush1.bf16.xpose.msra.mxu0 0
        %1140 = vmatprep.subr.bf16.mxu0 0
        %1141 = vmatpush1.bf16.xpose.msra.mxu0 0
        %1142 = vmatprep.subr.bf16.mxu0 0
        %1143 = vmatpush1.bf16.xpose.msra.mxu0 0
        %1144 = vmatprep.subr.bf16.mxu0 0
        %1145 = vmatpush1.bf16.xpose.msra.mxu0 0
        %1146 = vmatprep.subr.bf16.mxu0 0
        %1147 = vmatpush1.bf16.xpose.msra.mxu0 0
        %1148 = vmatprep.subr.bf16.mxu0 0
        %1149 = vmatpush1.bf16.xpose.msra.mxu0 0
        %1150 = vmatprep.subr.bf16.mxu0 0
        %1151 = vmatpush1.bf16.xpose.msra.mxu0 0
        %1152 = vmatprep.subr.bf16.mxu0 0
        %1153 = vmatpush1.bf16.xpose.msra.mxu0 0
        %1154 = vmatprep.subr.bf16.mxu0 0
        %1155 = vmatpush1.bf16.xpose.msra.mxu0 0
        %1156 = vmatprep.subr.bf16.mxu0 0
        %1157 = vmatpush1.bf16.xpose.msra.mxu0 0
        %1158 = vmatprep.subr.bf16.mxu0 0
        %1159 = vmatpush1.bf16.xpose.msra.mxu0 0
        %1160 = vmatprep.subr.bf16.mxu0 0
        %1161 = vmatpush1.bf16.xpose.msra.mxu0 0
        %1162 = vmatprep.subr.bf16.mxu0 0
        %1163 = vmatpush1.bf16.xpose.msra.mxu0 0
        %1164 = vmatprep.mubr.bf16.mxu0 0
        %1165 = vmatmul.mubr.bf16.gmra.mrb[0].mxu0 %v1127
        %v1166 = vpop.f32.mrb[0].mxu0
        %v1167 = vadd.f32 0.0, %v1166
        %v1168 = vpop.f32.mrb[0].mxu0
        %v1169 = vpop.f32.mrb[0].mxu0
        %v1170 = vpop.f32.mrb[0].mxu0
        %1171 = vdwg.mxu0
        %v1173 = vsel %vm844, %v695, 0
        %v1176 = vsel %vm844, %v1123, 0
        %1178 = vmatprep.subr.bf16.mxu0 0
        %1179 = vmatpush1.bf16.xpose.msra.mxu0 %v1176
        %1180 = vmatprep.subr.bf16.mxu0 0
        %1181 = vmatpush1.bf16.xpose.msra.mxu0 0
        %1182 = vmatprep.subr.bf16.mxu0 0
        %1183 = vmatpush1.bf16.xpose.msra.mxu0 0
        %1184 = vmatprep.subr.bf16.mxu0 0
        %1185 = vmatpush1.bf16.xpose.msra.mxu0 0
        %1186 = vmatprep.subr.bf16.mxu0 0
        %1187 = vmatpush1.bf16.xpose.msra.mxu0 0
        %1188 = vmatprep.subr.bf16.mxu0 0
        %1189 = vmatpush1.bf16.xpose.msra.mxu0 0
        %1190 = vmatprep.subr.bf16.mxu0 0
        %1191 = vmatpush1.bf16.xpose.msra.mxu0 0
        %1192 = vmatprep.subr.bf16.mxu0 0
        %1193 = vmatpush1.bf16.xpose.msra.mxu0 0
        %1194 = vmatprep.subr.bf16.mxu0 0
        %1195 = vmatpush1.bf16.xpose.msra.mxu0 0
        %1196 = vmatprep.subr.bf16.mxu0 0
        %1197 = vmatpush1.bf16.xpose.msra.mxu0 0
        %1198 = vmatprep.subr.bf16.mxu0 0
        %1199 = vmatpush1.bf16.xpose.msra.mxu0 0
        %1200 = vmatprep.subr.bf16.mxu0 0
        %1201 = vmatpush1.bf16.xpose.msra.mxu0 0
        %1202 = vmatprep.subr.bf16.mxu0 0
        %1203 = vmatpush1.bf16.xpose.msra.mxu0 0
        %1204 = vmatprep.subr.bf16.mxu0 0
        %1205 = vmatpush1.bf16.xpose.msra.mxu0 0
        %1206 = vmatprep.subr.bf16.mxu0 0
        %1207 = vmatpush1.bf16.xpose.msra.mxu0 0
        %1208 = vmatprep.subr.bf16.mxu0 0
        %1209 = vmatpush1.bf16.xpose.msra.mxu0 0
        %1210 = vmatprep.mubr.bf16.mxu0 0
        %1211 = vmatmul.mubr.bf16.gmra.mrb[0].mxu0 %v1173
        %v1212 = vpop.f32.mrb[0].mxu0
        %v1213 = vadd.f32 0.0, %v1212
        %v1214 = vpop.f32.mrb[0].mxu0
        %v1215 = vpop.f32.mrb[0].mxu0
        %v1216 = vpop.f32.mrb[0].mxu0
        %1217 = vdwg.mxu0
        %v1219 = vsel %vm844, %v696, 0
        %v1222 = vsel %vm844, %v1124, 0
        %1224 = vmatprep.subr.bf16.mxu0 0
        %1225 = vmatpush1.bf16.xpose.msra.mxu0 %v1222
        %1226 = vmatprep.subr.bf16.mxu0 0
        %1227 = vmatpush1.bf16.xpose.msra.mxu0 0
        %1228 = vmatprep.subr.bf16.mxu0 0
        %1229 = vmatpush1.bf16.xpose.msra.mxu0 0
        %1230 = vmatprep.subr.bf16.mxu0 0
        %1231 = vmatpush1.bf16.xpose.msra.mxu0 0
        %1232 = vmatprep.subr.bf16.mxu0 0
        %1233 = vmatpush1.bf16.xpose.msra.mxu0 0
        %1234 = vmatprep.subr.bf16.mxu0 0
        %1235 = vmatpush1.bf16.xpose.msra.mxu0 0
        %1236 = vmatprep.subr.bf16.mxu0 0
        %1237 = vmatpush1.bf16.xpose.msra.mxu0 0
        %1238 = vmatprep.subr.bf16.mxu0 0
        %1239 = vmatpush1.bf16.xpose.msra.mxu0 0
        %1240 = vmatprep.subr.bf16.mxu0 0
        %1241 = vmatpush1.bf16.xpose.msra.mxu0 0
        %1242 = vmatprep.subr.bf16.mxu0 0
        %1243 = vmatpush1.bf16.xpose.msra.mxu0 0
        %1244 = vmatprep.subr.bf16.mxu0 0
        %1245 = vmatpush1.bf16.xpose.msra.mxu0 0
        %1246 = vmatprep.subr.bf16.mxu0 0
        %1247 = vmatpush1.bf16.xpose.msra.mxu0 0
        %1248 = vmatprep.subr.bf16.mxu0 0
        %1249 = vmatpush1.bf16.xpose.msra.mxu0 0
        %1250 = vmatprep.subr.bf16.mxu0 0
        %1251 = vmatpush1.bf16.xpose.msra.mxu0 0
        %1252 = vmatprep.subr.bf16.mxu0 0
        %1253 = vmatpush1.bf16.xpose.msra.mxu0 0
        %1254 = vmatprep.subr.bf16.mxu0 0
        %1255 = vmatpush1.bf16.xpose.msra.mxu0 0
        %1256 = vmatprep.mubr.bf16.mxu0 0
        %1257 = vmatmul.mubr.bf16.gmra.mrb[0].mxu0 %v1219
        %v1258 = vpop.f32.mrb[0].mxu0
        %v1259 = vadd.f32 0.0, %v1258
        %v1260 = vpop.f32.mrb[0].mxu0
        %v1261 = vpop.f32.mrb[0].mxu0
        %v1262 = vpop.f32.mrb[0].mxu0
        %1263 = vdwg.mxu0
        %v1265 = vsel %vm844, %v697, 0
        %v1268 = vsel %vm844, %v1125, 0
        %1270 = vmatprep.subr.bf16.mxu0 0
        %1271 = vmatpush1.bf16.xpose.msra.mxu0 %v1268
        %1272 = vmatprep.subr.bf16.mxu0 0
        %1273 = vmatpush1.bf16.xpose.msra.mxu0 0
        %1274 = vmatprep.subr.bf16.mxu0 0
        %1275 = vmatpush1.bf16.xpose.msra.mxu0 0
        %1276 = vmatprep.subr.bf16.mxu0 0
        %1277 = vmatpush1.bf16.xpose.msra.mxu0 0
        %1278 = vmatprep.subr.bf16.mxu0 0
        %1279 = vmatpush1.bf16.xpose.msra.mxu0 0
        %1280 = vmatprep.subr.bf16.mxu0 0
        %1281 = vmatpush1.bf16.xpose.msra.mxu0 0
        %1282 = vmatprep.subr.bf16.mxu0 0
        %1283 = vmatpush1.bf16.xpose.msra.mxu0 0
        %1284 = vmatprep.subr.bf16.mxu0 0
        %1285 = vmatpush1.bf16.xpose.msra.mxu0 0
        %1286 = vmatprep.subr.bf16.mxu0 0
        %1287 = vmatpush1.bf16.xpose.msra.mxu0 0
        %1288 = vmatprep.subr.bf16.mxu0 0
        %1289 = vmatpush1.bf16.xpose.msra.mxu0 0
        %1290 = vmatprep.subr.bf16.mxu0 0
        %1291 = vmatpush1.bf16.xpose.msra.mxu0 0
        %1292 = vmatprep.subr.bf16.mxu0 0
        %1293 = vmatpush1.bf16.xpose.msra.mxu0 0
        %1294 = vmatprep.subr.bf16.mxu0 0
        %1295 = vmatpush1.bf16.xpose.msra.mxu0 0
        %1296 = vmatprep.subr.bf16.mxu0 0
        %1297 = vmatpush1.bf16.xpose.msra.mxu0 0
        %1298 = vmatprep.subr.bf16.mxu0 0
        %1299 = vmatpush1.bf16.xpose.msra.mxu0 0
        %1300 = vmatprep.subr.bf16.mxu0 0
        %1301 = vmatpush1.bf16.xpose.msra.mxu0 0
        %1302 = vmatprep.mubr.bf16.mxu0 0
        %1303 = vmatmul.mubr.bf16.gmra.mrb[0].mxu0 %v1265
        %v1304 = vpop.f32.mrb[0].mxu0
        %v1305 = vadd.f32 0.0, %v1304
        %v1306 = vpop.f32.mrb[0].mxu0
        %v1307 = vpop.f32.mrb[0].mxu0
        %v1308 = vpop.f32.mrb[0].mxu0
        %1309 = vdwg.mxu0
        %v1310 = vpack.c.bf16 %v1213, %v1167
        %v1311 = vpack.c.bf16 %v1305, %v1259
        %v1312 = vld [vmem:[%s3] sm:$0xf]
        %v1313 = vld [vmem:[%s3 + $0x4] sm:$0xf]
        %v1314 = vld [vmem:[%s3 + $0x8] sm:$0xf]
        %v1315 = vld [vmem:[%s3 + $0xc] sm:$0xf]
        %v1316 = vld [vmem:[%s4] sm:$0x1]
        %v1318 = vlaneseq
        %v1319 = vshrl.u32 %v1318, 7
        %v1320 = vsub.s32 0, %v1319
        %v1321 = vrot.slane %v1316, %v1320
        %1323 = vxpose.xlu0.c.b16.start [1/8] %v1310, 128
        %1324 = vxpose.xlu0.c.b16.cont [2/8] %v1311, 128
        %1325 = vxpose.xlu0.c.b16.cont [3/8] 0, 128
        %1326 = vxpose.xlu0.c.b16.cont [4/8] 0, 128
        %1327 = vxpose.xlu0.c.b16.cont [5/8] 0, 128
        %1328 = vxpose.xlu0.c.b16.cont [6/8] 0, 128
        %1329 = vxpose.xlu0.c.b16.cont [7/8] 0, 128
        %1330 = vxpose.xlu0.c.b16.end [8/8] 0, 128
        %v1331 = vpop.trf.xlu0
        %v1332 = vpop.trf.xlu0
        %v1333 = vpop.trf.xlu0
        %v1334 = vpop.trf.xlu0
        %v1335 = vpop.trf.xlu0
        %v1336 = vpop.trf.xlu0
        %v1337 = vpop.trf.xlu0
        %v1338 = vpop.trf.xlu0
        %v1343 = vunpack.c.l.b16 %v1312
        %v1344 = vunpack.c.l.b16 %v1313
        %v1345 = vunpack.c.l.b16 %v1314
        %v1346 = vunpack.c.l.b16 %v1315
        %v1347 = vpack.c.b16 %v1344, %v1343
        %v1348 = vpack.c.b16 %v1346, %v1345
        %v1352 = vsel %vm455, %v1331, 0
        %1354 = vmatprep.subr.bf16.mxu0 0
        %1355 = vmatpush1.bf16.msra.mxu0 %v1347
        %1356 = vmatprep.subr.bf16.mxu0 0
        %1357 = vmatpush1.bf16.msra.mxu0 %v1348
        %1358 = vmatprep.subr.bf16.mxu0 0
        %1359 = vmatpush1.bf16.msra.mxu0 0
        %1360 = vmatprep.subr.bf16.mxu0 0
        %1361 = vmatpush1.bf16.msra.mxu0 0
        %1362 = vmatprep.subr.bf16.mxu0 0
        %1363 = vmatpush1.bf16.msra.mxu0 0
        %1364 = vmatprep.subr.bf16.mxu0 0
        %1365 = vmatpush1.bf16.msra.mxu0 0
        %1366 = vmatprep.subr.bf16.mxu0 0
        %1367 = vmatpush1.bf16.msra.mxu0 0
        %1368 = vmatprep.subr.bf16.mxu0 0
        %1369 = vmatpush1.bf16.msra.mxu0 0
        %1370 = vmatprep.subr.bf16.mxu0 0
        %1371 = vmatpush1.bf16.msra.mxu0 0
        %1372 = vmatprep.subr.bf16.mxu0 0
        %1373 = vmatpush1.bf16.msra.mxu0 0
        %1374 = vmatprep.subr.bf16.mxu0 0
        %1375 = vmatpush1.bf16.msra.mxu0 0
        %1376 = vmatprep.subr.bf16.mxu0 0
        %1377 = vmatpush1.bf16.msra.mxu0 0
        %1378 = vmatprep.subr.bf16.mxu0 0
        %1379 = vmatpush1.bf16.msra.mxu0 0
        %1380 = vmatprep.subr.bf16.mxu0 0
        %1381 = vmatpush1.bf16.msra.mxu0 0
        %1382 = vmatprep.subr.bf16.mxu0 0
        %1383 = vmatpush1.bf16.msra.mxu0 0
        %1384 = vmatprep.subr.bf16.mxu0 0
        %1385 = vmatpush1.bf16.msra.mxu0 0
        %1386 = vmatprep.mubr.bf16.mxu0 0
        %1387 = vmatmul.mubr.bf16.gmra.mrb[0].mxu0 %v1352
        %v1388 = vpop.f32.mrb[0].mxu0
        %v1389 = vadd.f32 %v1321, %v1388
        %v1390 = vpop.f32.mrb[0].mxu0
        %v1391 = vpop.f32.mrb[0].mxu0
        %v1392 = vpop.f32.mrb[0].mxu0
        %1393 = vdwg.mxu0
        %v1394 = vadd.f32 %v699, %v1389
        %v1395 = vld [vmem:[%s7] sm:$0x1]
        %v1396 = vld [vmem:[%s8] sm:$0x1]
        %v1397 = vsel %vm455, %v1394, 0.0
        %1398 = vadd.xlane.f32.xlu0 %v1397
        %v1399 = vpop.xlane.xlu0 %1398
        %v1400 = vmul.f32 %v1399, %v459
        %v1401 = vsub.f32 %v1394, %v1400
        %v1402 = vmul.f32 %v1401, %v1401
        %v1403 = vsel %vm455, %v1402, 0.0
        %1404 = vadd.xlane.f32.xlu0 %v1403
        %v1405 = vpop.xlane.xlu0 %1404
        %v1406 = vmul.f32 %v1405, %v459
        %v1407 = vadd.f32 %v1406, 1e-06
        %v1408 = vrsqrt.pop %v1407
        %v1409 = vmul.f32 %v1401, %v1408
        %v1411 = vlaneseq
        %v1412 = vshrl.u32 %v1411, 7
        %v1413 = vsub.s32 0, %v1412
        %v1414 = vrot.slane %v1395, %v1413
        %v1416 = vmul.f32 %v1409, %v1414
        %v1418 = vlaneseq
        %v1419 = vshrl.u32 %v1418, 7
        %v1420 = vsub.s32 0, %v1419
        %v1421 = vrot.slane %v1396, %v1420
        %v1423 = vadd.f32 %v1416, %v1421
        %v1424 = vpack.c.bf16 %v1423, %v1423
        %v1425 = vld [vmem:[%s9] sm:$0xf]
        %v1426 = vld [vmem:[%s9 + $0x4] sm:$0xf]
        %v1427 = vld [vmem:[%s9 + $0x8] sm:$0xf]
        %v1428 = vld [vmem:[%s9 + $0xc] sm:$0xf]
        %v1429 = vld [vmem:[%s10] sm:$0x1]
        %v1431 = vlaneseq
        %v1432 = vshrl.u32 %v1431, 7
        %v1433 = vsub.s32 0, %v1432
        %v1434 = vrot.slane %v1429, %v1433
        %v1440 = vunpack.c.l.b16 %v1425
        %v1441 = vunpack.c.l.b16 %v1426
        %v1442 = vunpack.c.l.b16 %v1427
        %v1443 = vunpack.c.l.b16 %v1428
        %v1444 = vpack.c.b16 %v1441, %v1440
        %v1445 = vpack.c.b16 %v1443, %v1442
        %v1449 = vsel %vm455, %v1424, 0
        %1451 = vmatprep.subr.bf16.mxu0 0
        %1452 = vmatpush1.bf16.msra.mxu0 %v1444
        %1453 = vmatprep.subr.bf16.mxu0 0
        %1454 = vmatpush1.bf16.msra.mxu0 %v1445
        %1455 = vmatprep.subr.bf16.mxu0 0
        %1456 = vmatpush1.bf16.msra.mxu0 0
        %1457 = vmatprep.subr.bf16.mxu0 0
        %1458 = vmatpush1.bf16.msra.mxu0 0
        %1459 = vmatprep.subr.bf16.mxu0 0
        %1460 = vmatpush1.bf16.msra.mxu0 0
        %1461 = vmatprep.subr.bf16.mxu0 0
        %1462 = vmatpush1.bf16.msra.mxu0 0
        %1463 = vmatprep.subr.bf16.mxu0 0
        %1464 = vmatpush1.bf16.msra.mxu0 0
        %1465 = vmatprep.subr.bf16.mxu0 0
        %1466 = vmatpush1.bf16.msra.mxu0 0
        %1467 = vmatprep.subr.bf16.mxu0 0
        %1468 = vmatpush1.bf16.msra.mxu0 0
        %1469 = vmatprep.subr.bf16.mxu0 0
        %1470 = vmatpush1.bf16.msra.mxu0 0
        %1471 = vmatprep.subr.bf16.mxu0 0
        %1472 = vmatpush1.bf16.msra.mxu0 0
        %1473 = vmatprep.subr.bf16.mxu0 0
        %1474 = vmatpush1.bf16.msra.mxu0 0
        %1475 = vmatprep.subr.bf16.mxu0 0
        %1476 = vmatpush1.bf16.msra.mxu0 0
        %1477 = vmatprep.subr.bf16.mxu0 0
        %1478 = vmatpush1.bf16.msra.mxu0 0
        %1479 = vmatprep.subr.bf16.mxu0 0
        %1480 = vmatpush1.bf16.msra.mxu0 0
        %1481 = vmatprep.subr.bf16.mxu0 0
        %1482 = vmatpush1.bf16.msra.mxu0 0
        %1483 = vmatprep.mubr.bf16.mxu0 0
        %1484 = vmatmul.mubr.bf16.gmra.mrb[0].mxu0 %v1449
        %v1485 = vpop.f32.mrb[0].mxu0
        %v1486 = vadd.f32 %v1434, %v1485
        %v1487 = vpop.f32.mrb[0].mxu0
        %v1488 = vpop.f32.mrb[0].mxu0
        %v1489 = vpop.f32.mrb[0].mxu0
        %1490 = vdwg.mxu0
        %v1491 = vmul.f32 %v1486, 0.5
        %v1492 = vmul.f32 %v1486, 0.70710677
        %v1493 = verf.f32.pop %v1492
        %v1494 = vadd.f32 %v1493, 1.0
        %v1495 = vmul.f32 %v1491, %v1494
        %v1496 = vpack.c.bf16 %v1495, %v1495
        %v1497 = vld [vmem:[%s11] sm:$0xf]
        %v1498 = vld [vmem:[%s11 + $0x4] sm:$0xf]
        %v1499 = vld [vmem:[%s11 + $0x8] sm:$0xf]
        %v1500 = vld [vmem:[%s11 + $0xc] sm:$0xf]
        %v1501 = vld [vmem:[%s11 + $0x10] sm:$0xf]
        %v1502 = vld [vmem:[%s11 + $0x14] sm:$0xf]
        %v1503 = vld [vmem:[%s11 + $0x18] sm:$0xf]
        %v1504 = vld [vmem:[%s11 + $0x1c] sm:$0xf]
        %v1505 = vld [vmem:[%s11 + $0x20] sm:$0xf]
        %v1506 = vld [vmem:[%s11 + $0x24] sm:$0xf]
        %v1507 = vld [vmem:[%s11 + $0x28] sm:$0xf]
        %v1508 = vld [vmem:[%s11 + $0x2c] sm:$0xf]
        %v1509 = vld [vmem:[%s11 + $0x30] sm:$0xf]
        %v1510 = vld [vmem:[%s11 + $0x34] sm:$0xf]
        %v1511 = vld [vmem:[%s11 + $0x38] sm:$0xf]
        %v1512 = vld [vmem:[%s11 + $0x3c] sm:$0xf]
        %v1513 = vld [vmem:[%s12] sm:$0x1]
        %v1515 = vlaneseq
        %v1516 = vshrl.u32 %v1515, 7
        %v1517 = vsub.s32 0, %v1516
        %v1518 = vrot.slane %v1513, %v1517
        %v1536 = vunpack.c.l.b16 %v1497
        %v1537 = vunpack.c.l.b16 %v1498
        %v1538 = vunpack.c.l.b16 %v1499
        %v1539 = vunpack.c.l.b16 %v1500
        %v1540 = vunpack.c.l.b16 %v1501
        %v1541 = vunpack.c.l.b16 %v1502
        %v1542 = vunpack.c.l.b16 %v1503
        %v1543 = vunpack.c.l.b16 %v1504
        %v1544 = vunpack.c.l.b16 %v1505
        %v1545 = vunpack.c.l.b16 %v1506
        %v1546 = vunpack.c.l.b16 %v1507
        %v1547 = vunpack.c.l.b16 %v1508
        %v1548 = vunpack.c.l.b16 %v1509
        %v1549 = vunpack.c.l.b16 %v1510
        %v1550 = vunpack.c.l.b16 %v1511
        %v1551 = vunpack.c.l.b16 %v1512
        %v1552 = vpack.c.b16 %v1537, %v1536
        %v1553 = vpack.c.b16 %v1539, %v1538
        %v1554 = vpack.c.b16 %v1541, %v1540
        %v1555 = vpack.c.b16 %v1543, %v1542
        %v1556 = vpack.c.b16 %v1545, %v1544
        %v1557 = vpack.c.b16 %v1547, %v1546
        %v1558 = vpack.c.b16 %v1549, %v1548
        %v1559 = vpack.c.b16 %v1551, %v1550
        %1568 = vmatprep.subr.bf16.mxu0 0
        %1569 = vmatpush1.bf16.msra.mxu0 %v1552
        %1570 = vmatprep.subr.bf16.mxu0 0
        %1571 = vmatpush1.bf16.msra.mxu0 %v1553
        %1572 = vmatprep.subr.bf16.mxu0 0
        %1573 = vmatpush1.bf16.msra.mxu0 %v1554
        %1574 = vmatprep.subr.bf16.mxu0 0
        %1575 = vmatpush1.bf16.msra.mxu0 %v1555
        %1576 = vmatprep.subr.bf16.mxu0 0
        %1577 = vmatpush1.bf16.msra.mxu0 %v1556
        %1578 = vmatprep.subr.bf16.mxu0 0
        %1579 = vmatpush1.bf16.msra.mxu0 %v1557
        %1580 = vmatprep.subr.bf16.mxu0 0
        %1581 = vmatpush1.bf16.msra.mxu0 %v1558
        %1582 = vmatprep.subr.bf16.mxu0 0
        %1583 = vmatpush1.bf16.msra.mxu0 %v1559
        %1584 = vmatprep.subr.bf16.mxu0 0
        %1585 = vmatpush1.bf16.msra.mxu0 0
        %1586 = vmatprep.subr.bf16.mxu0 0
        %1587 = vmatpush1.bf16.msra.mxu0 0
        %1588 = vmatprep.subr.bf16.mxu0 0
        %1589 = vmatpush1.bf16.msra.mxu0 0
        %1590 = vmatprep.subr.bf16.mxu0 0
        %1591 = vmatpush1.bf16.msra.mxu0 0
        %1592 = vmatprep.subr.bf16.mxu0 0
        %1593 = vmatpush1.bf16.msra.mxu0 0
        %1594 = vmatprep.subr.bf16.mxu0 0
        %1595 = vmatpush1.bf16.msra.mxu0 0
        %1596 = vmatprep.subr.bf16.mxu0 0
        %1597 = vmatpush1.bf16.msra.mxu0 0
        %1598 = vmatprep.subr.bf16.mxu0 0
        %1599 = vmatpush1.bf16.msra.mxu0 0
        %1600 = vmatprep.mubr.bf16.mxu0 0
        %1601 = vmatmul.mubr.bf16.gmra.mrb[0].mxu0 %v1496
        %v1602 = vpop.f32.mrb[0].mxu0
        %v1603 = vadd.f32 %v1518, %v1602
        %v1604 = vpop.f32.mrb[0].mxu0
        %v1605 = vpop.f32.mrb[0].mxu0
        %v1606 = vpop.f32.mrb[0].mxu0
        %1607 = vdwg.mxu0
        %v1608 = vadd.f32 %v1394, %v1603
        %1609 = vst.msk [vmem:[%s445] sm:$0xff] %vm455, %v1608
        %s1610 = sand.u32 %s327, 1
        %s1611 = scalar_lea.sflag [#allocation3], %s1610
        %s1612 = sand.u32 %s327, 1
        %s1613 = smul.addr %s1612, 8
        %s1614 = scalar_lea.vmem [#allocation2], %s1613
        // Predicated region
        $region73: #{tpu_custom_call.1} parent=71 // pred_check
          %p1615 = pneg %p337
        $region74: #{tpu_custom_call.1} parent=71 // pred_check_branch
          %1617 = sbr.rel (%p1615) target = $region76
        $region75: #{tpu_custom_call.1} parent=71 // pred_region
          %s1619 = ssub.s32 128, 128
          %1620 = vsyncadd %s1611, %s1619
          %s1621 = sadd.s32 %s32, %s31
          %s1622 = smul.addr %s1621, 128
          %s1623 = scalar_lea.hbm %s13, %s1622
          %s1625 = sshll.u32 %s1614, 4
          %s1626 = int_to_ptr.vmem [resolvable:$true] %s1625
          %1628 = dma.vmem_to_hbm [thread:$0]  %s1626, 128, %s1623, %s1611
        $region76: #{tpu_custom_call.1} parent=71 // pred_fallthru
          _
      $region72: #{tpu_custom_call.1} parent=5 // pred_fallthru
        _
      %p1629 = scmp.le.s32.totalorder 2, %s22
      // Predicated region
      $region77: #{tpu_custom_call.1} parent=5 // pred_check
        %p1630 = pneg %p1629
      $region78: #{tpu_custom_call.1} parent=5 // pred_check_branch
        %1632 = sbr.rel (%p1630) target = $region80
      $region79: #{tpu_custom_call.1} parent=5 // pred_region
        %s1633 = ssub.s32 %s22, 2
        // Predicated region
        $region81: #{tpu_custom_call.1} parent=79 // pred_check
          %p1634 = pneg %p343
        $region82: #{tpu_custom_call.1} parent=79 // pred_check_branch
          %1636 = sbr.rel (%p1634) target = $region84
        $region83: #{tpu_custom_call.1} parent=79 // pred_region
          %s1637 = sand.u32 %s328, 1
          %s1638 = scalar_lea.sflag [#allocation3], %s1637
          %s1639 = sand.u32 %s328, 1
          %s1640 = smul.addr %s1639, 8
          %s1641 = scalar_lea.vmem [#allocation2], %s1640
          %1642 = dma.done %s1638, 128
        $region84: #{tpu_custom_call.1} parent=79 // pred_fallthru
          _
      $region80: #{tpu_custom_call.1} parent=5 // pred_fallthru
        _
    $region6: #{tpu_custom_call.1} parent=1 // loop_footer
      %s26 = sadd.s32 1, %s22
    $region7: #{tpu_custom_call.1} parent=1 // loop_footer_branch
      %21 = sbr.rel target = $region3
    $region8: #{tpu_custom_call.1} parent=1 // loop_exit
      _
    %1643 = vsyncpa [#allocation3], 1
    %s1644 = scalar_lea.sflag [#allocation3], 1
    %1645 = vsyncpa %s1644, 1

</llo_original>
